<compile_context>
chip_gen: v7x
topology: tpu7x:2x2x1
jax: 0.10.0
libtpu: 0.0.40
codegen_flags: <defaults>
</compile_context>

<pallas_src>
import math
import numpy as np
import jax
import jax.numpy as jnp
from jax.experimental import pallas as pl
from jax.experimental.pallas import tpu as pltpu


# ---------------------------------------------------------------------------
# PolyPowers replication (static, trace-time)
# ---------------------------------------------------------------------------
def get_powers(dim, degree):
    if dim == 1:
        yield (degree,)
    else:
        for value in range(degree + 1):
            for perm in get_powers(dim - 1, degree - value):
                yield (value,) + perm


def calculate_powers(input_features, degree):
    if input_features == 1:
        return np.array([[degree]], dtype=np.int32)
    powers = list(get_powers(input_features, degree))
    # torch.stack([...], dim=1) -> shape (input_features, num_terms)
    return np.stack([np.array(p, dtype=np.int32) for p in powers], axis=1)   # (C, P)


def homopoly(dim, degree):
    return int(math.factorial(degree + dim - 1)
               // (math.factorial(degree) * math.factorial(dim - 1)))


# ---------------------------------------------------------------------------
# Pallas kernel: fused (x, y) homogeneous-polynomial projector
# ---------------------------------------------------------------------------
def make_poly_projector_kernel(powers_np, p_pad):
    C, _ = powers_np.shape
    kmaxs = [int(powers_np[c].max()) for c in range(C)]   # static python ints

    def kernel(xT_ref, wn_ref, pwT_ref, o_ref):
        x = xT_ref[...].astype(jnp.float32)          # (C, TN)  -- samples on lanes
        pw = pwT_ref[...]                            # (P_pad, C) f32 exponent table
        tn = x.shape[1]

        # Build monomials (P_pad, TN): per channel, pick x_c^k per monomial row
        # with nested selects on (P_pad,1) masks; implicit broadcasts only.
        mono = None
        for c in range(C):
            kmax = kmaxs[c]
            if kmax == 0:
                continue
            xrow = x[c:c + 1, :]                     # (1, TN)
            pcol = pw[:, c:c + 1]                    # (P_pad, 1)
            xpows = [xrow]                           # x, x^2, ..., x^kmax  (1, TN)
            for _ in range(kmax - 1):
                xpows.append(xpows[-1] * xrow)
            plane = jnp.where(pcol == 1.0, xpows[0], 1.0)          # exponent 0 -> 1
            for k in range(2, kmax + 1):
                plane = jnp.where(pcol == float(k), xpows[k - 1], plane)
            mono = plane if mono is None else mono * plane
        if mono is None:                             # degree == 0 corner case
            mono = jnp.ones((p_pad, tn), jnp.float32)

        # (F_pad, P_pad) @ (P_pad, TN) -> (F_pad, TN): lane-dense unmasked stores.
        o_ref[...] = jnp.dot(wn_ref[...], mono,
                             preferred_element_type=jnp.float32).astype(o_ref.dtype)

    return kernel


def poly_projector_pair(x, y, w, powers_np, *, tile_n=2048):
    """x, y: (N, C) f32; w: (final_dim, P) f32.

    Returns (x_proj, y_proj), each lane-dense (final_dim, N), computed in a
    single fused pallas_call."""
    N, C = x.shape
    assert y.shape == (N, C)
    F_, P = w.shape
    assert powers_np.shape == (C, P)
    assert tile_n % 128 == 0

    # Row-normalize W once in plain JAX (F.normalize: w / max(||w||, 1e-12));
    # a dedicated kernel launch for 32x10 floats is pure dispatch overhead.
    w = w.astype(jnp.float32)
    norm = jnp.sqrt(jnp.sum(w * w, axis=1, keepdims=True))
    w_n = w / jnp.maximum(norm, 1e-12)

    # Pad P and F to sublane multiples of 8; padded W cols/rows are zero so the
    # result is exact, padded outputs are sliced off below.
    p_pad = max(8, ((P + 7) // 8) * 8)
    f_pad = max(8, ((F_ + 7) // 8) * 8)
    w_n = jnp.pad(w_n, ((0, f_pad - F_), (0, p_pad - P)))
    pwT = jnp.asarray(np.pad(powers_np.T.astype(np.float32),
                             ((0, p_pad - P), (0, 0))))                 # (P_pad, C)

    # Lane-dense layout: samples on the lane axis; fuse x and y along lanes so
    # both distributions run in one pallas_call.  At N == tile_n this is a
    # 2-step "parallel" grid: one distribution per v7x TensorCore, and only one
    # extra ~0.35us step on single-TC v5e/v6e.
    n_pad = ((N + tile_n - 1) // tile_n) * tile_n

    def to_lanes(a):
        aT = jnp.transpose(a.astype(jnp.float32))                        # (C, N)
        return jnp.pad(aT, ((0, 0), (0, n_pad - N))) if n_pad != N else aT

    xyT = jnp.concatenate([to_lanes(x), to_lanes(y)], axis=1)            # (C, 2*n_pad)
    total_n = 2 * n_pad
    grid = (total_n // tile_n,)

    kernel = make_poly_projector_kernel(powers_np, p_pad)
    outT = pl.pallas_call(
        kernel,
        out_shape=jax.ShapeDtypeStruct((f_pad, total_n), jnp.float32),
        grid_spec=pltpu.PrefetchScalarGridSpec(
            num_scalar_prefetch=0,
            grid=grid,
            in_specs=[
                pl.BlockSpec((C, tile_n), lambda i: (0, i)),       # fused x/y tile
                pl.BlockSpec((f_pad, p_pad), lambda i: (0, 0)),    # resident weights
                pl.BlockSpec((p_pad, C), lambda i: (0, 0)),        # exponent table
            ],
            out_specs=pl.BlockSpec((f_pad, tile_n), lambda i: (0, i)),
        ),
        compiler_params=pltpu.CompilerParams(
            dimension_semantics=("parallel",),
        ),
    )(xyT, w_n, pwT)

    # Keep lane-dense (F, N) outputs; padding sliced off BEFORE any sort.
    x_proj = outT[:F_, :N]
    y_proj = outT[:F_, n_pad:n_pad + N]
    return x_proj, y_proj


# ---------------------------------------------------------------------------
# GSWD / MGSWD forward (sort + loss and the inner maximization stay in JAX)
# ---------------------------------------------------------------------------
def _sliced_loss(x_proj, y_proj, loss_type, axis):
    xs = jnp.sort(x_proj, axis=axis)
    ys = jnp.sort(y_proj, axis=axis)
    d = xs - ys
    if loss_type == 'l1':
        return jnp.mean(jnp.abs(d))
    return jnp.mean(d * d)


def gswd(x, y, w, powers_np, *, loss_type='l1', tile_n=2048):
    # TODO(synk): torch.sort along the sample axis + the mean reduction have no
    # clean Pallas equivalent; projections run in the fused Pallas kernel, the
    # sort/mean stay in plain JAX (along the lane-dense axis=-1).
    xp, yp = poly_projector_pair(x, y, w, powers_np, tile_n=tile_n)
    return _sliced_loss(xp, yp, loss_type, axis=-1)


def poly_projector_ref(x, w, powers_np):
    """Pure-JAX reference projector (also used for the inner autograd loop)."""
    N, C = x.shape
    _, P = powers_np.shape
    cols = []
    for p in range(P):
        col = jnp.ones((N,), x.dtype)
        for c in range(C):
            k = int(powers_np[c, p])
            if k > 0:
                col = col * x[:, c] ** k
        cols.append(col)
    monomials = jnp.stack(cols, axis=-1)                      # (N, P)
    norm = jnp.sqrt(jnp.sum(w * w, axis=1, keepdims=True))
    w_n = w / jnp.maximum(norm, 1e-12)
    return jnp.matmul(monomials, w_n.T, precision=jax.lax.Precision.HIGHEST)


def gswd_ref(x, y, w, powers_np, loss_type='l1'):
    return _sliced_loss(poly_projector_ref(x, w, powers_np),
                        poly_projector_ref(y, w, powers_np), loss_type, axis=-2)


def mgswd(x, y, w_init, powers_np, *, loss_type='l1', lr=0.1, iterations=10,
          tile_n=2048):
    """Max-GSWD: Adam-maximize the sliced distance over W, then evaluate it."""
    # TODO(synk): the inner Adam maximization needs autograd through the
    # projector; pallas_call has no autodiff rule here, so the sub-optimization
    # differentiates the pure-JAX reference projector (inside one jitted
    # lax.fori_loop).  The final distance uses the Pallas kernel.
    x_d = jax.lax.stop_gradient(x)
    y_d = jax.lax.stop_gradient(y)
    b1, b2, eps = 0.9, 0.999, 1e-8

    def neg_dist(w, xd, yd):
        return -gswd_ref(xd, yd, w, powers_np, loss_type)

    @jax.jit
    def maximize(w0, xd, yd):
        def body(i, carry):
            w, m, v = carry
            g = jax.grad(neg_dist)(w, xd, yd)
            m = b1 * m + (1.0 - b1) * g
            v = b2 * v + (1.0 - b2) * (g * g)
            t = (i + 1).astype(jnp.float32)
            m_hat = m / (1.0 - b1 ** t)
            v_hat = v / (1.0 - b2 ** t)
            w = w - lr * m_hat / (jnp.sqrt(v_hat) + eps)
            return w, m, v
        w, _, _ = jax.lax.fori_loop(
            0, iterations, body,
            (w0, jnp.zeros_like(w0), jnp.zeros_like(w0)))
        return w

    w = maximize(w_init.astype(jnp.float32), x_d, y_d)

    final = jax.jit(lambda xx, yy, ww: gswd(xx, yy, ww, powers_np,
                                            loss_type=loss_type, tile_n=tile_n))
    return final(x, y, w), w


# ---------------------------------------------------------------------------
if __name__ == "__main__":
    # Projector config: PolyProjector(input_features=3, degree=3, final_dim=32)
    input_features = 3      # C
    degree = 3
    final_dim = 32          # F (number of slices)
    N = 2048                # points per distribution
    tile_n = 2048           # fused x/y -> grid=(2,): one distribution per TC

    powers_np = calculate_powers(input_features, degree)      # (3, 10)
    P = homopoly(input_features, degree)
    assert powers_np.shape == (input_features, P)

    key = jax.random.PRNGKey(0)
    kx, ky, kw = jax.random.split(key, 3)
    x = jax.random.normal(kx, (N, input_features), dtype=jnp.float32)
    y = 0.5 * jax.random.normal(ky, (N, input_features), dtype=jnp.float32) + 0.25
    # Stand-in for projector.reset(force=True): fresh random projection matrix.
    w0 = jax.random.normal(kw, (final_dim, P), dtype=jnp.float32)

    # --- Fused Pallas projector vs pure-JAX reference ---
    xp, yp = poly_projector_pair(x, y, w0, powers_np, tile_n=tile_n)
    xp = jax.block_until_ready(xp)
    yp = jax.block_until_ready(yp)
    xp_ref = poly_projector_ref(x, w0, powers_np)              # (N, F)
    yp_ref = poly_projector_ref(y, w0, powers_np)
    assert xp.shape == (final_dim, N) and yp.shape == (final_dim, N)
    assert jnp.allclose(xp, xp_ref.T, atol=1e-3, rtol=1e-3), "x projector mismatch"
    assert jnp.allclose(yp, yp_ref.T, atol=1e-3, rtol=1e-3), "y projector mismatch"

    # --- MGSWD forward (jitted inner maximization + final GSWD via Pallas) ---
    dist, w_opt = mgswd(x, y, w0, powers_np, loss_type='l1',
                        lr=0.1, iterations=10, tile_n=tile_n)
    dist = jax.block_until_ready(dist)
    dist_ref = jax.block_until_ready(gswd_ref(x, y, w_opt, powers_np, 'l1'))
    assert bool(jnp.isfinite(dist)), "non-finite distance"
    assert jnp.allclose(dist, dist_ref, atol=1e-3, rtol=1e-3), "distance mismatch"

    print("KERNEL_OK")
</pallas_src>

<mosaic_0001>
module attributes {stable_mosaic.version = 11 : i64} {
  func.func @kernel(%arg0: i32, %arg1: memref<3x2048xf32, #tpu.memory_space<vmem>>, %arg2: memref<32x16xf32, #tpu.memory_space<vmem>>, %arg3: memref<16x3xf32, #tpu.memory_space<vmem>>, %arg4: memref<32x2048xf32, #tpu.memory_space<vmem>>) attributes {dimension_semantics = [#tpu.dimension_semantics<parallel>], iteration_bounds = array<i64: 2>, scalar_prefetch = 0 : i64, scratch_operands = 0 : i64, tpu.core_type = #tpu.core_type<tc>, window_params = [{transform_indices = @transform_0, window_bounds = array<i64: 3, 2048>}, {pipeline_mode = #tpu.pipeline_mode<synchronous>, transform_indices = @transform_1, window_bounds = array<i64: 32, 16>}, {pipeline_mode = #tpu.pipeline_mode<synchronous>, transform_indices = @transform_2, window_bounds = array<i64: 16, 3>}, {transform_indices = @transform_3, window_bounds = array<i64: 32, 2048>}]} {
    %c0 = arith.constant 0 : index
    %c0_0 = arith.constant 0 : index
    %0 = vector.load %arg1[%c0, %c0_0] : memref<3x2048xf32, #tpu.memory_space<vmem>>, vector<3x2048xf32>
    %c0_1 = arith.constant 0 : index
    %c0_2 = arith.constant 0 : index
    %1 = vector.load %arg3[%c0_1, %c0_2] : memref<16x3xf32, #tpu.memory_space<vmem>>, vector<16x3xf32>
    %2 = vector.extract_strided_slice %0 {offsets = [0, 0], sizes = [1, 2048], strides = [1, 1]} : vector<3x2048xf32> to vector<1x2048xf32>
    %3 = vector.extract_strided_slice %1 {offsets = [0, 0], sizes = [16, 1], strides = [1, 1]} : vector<16x3xf32> to vector<16x1xf32>
    %4 = arith.mulf %2, %2 : vector<1x2048xf32>
    %5 = arith.mulf %4, %2 : vector<1x2048xf32>
    %cst = arith.constant 1.000000e+00 : f32
    %6 = vector.broadcast %cst : f32 to vector<16x1xf32>
    %7 = arith.cmpf oeq, %3, %6 : vector<16x1xf32>
    %cst_3 = arith.constant 1.000000e+00 : f32
    %8 = vector.shape_cast %7 : vector<16x1xi1> to vector<16x1xi1>
    %9 = vector.broadcast %8 : vector<16x1xi1> to vector<16x2048xi1>
    %10 = vector.shape_cast %2 : vector<1x2048xf32> to vector<1x2048xf32>
    %11 = vector.broadcast %10 : vector<1x2048xf32> to vector<16x2048xf32>
    %12 = vector.broadcast %cst_3 : f32 to vector<16x2048xf32>
    %13 = arith.select %9, %11, %12 : vector<16x2048xi1>, vector<16x2048xf32>
    %cst_4 = arith.constant 2.000000e+00 : f32
    %14 = vector.broadcast %cst_4 : f32 to vector<16x1xf32>
    %15 = arith.cmpf oeq, %3, %14 : vector<16x1xf32>
    %16 = vector.shape_cast %15 : vector<16x1xi1> to vector<16x1xi1>
    %17 = vector.broadcast %16 : vector<16x1xi1> to vector<16x2048xi1>
    %18 = vector.shape_cast %4 : vector<1x2048xf32> to vector<1x2048xf32>
    %19 = vector.broadcast %18 : vector<1x2048xf32> to vector<16x2048xf32>
    %20 = arith.select %17, %19, %13 : vector<16x2048xi1>, vector<16x2048xf32>
    %cst_5 = arith.constant 3.000000e+00 : f32
    %21 = vector.broadcast %cst_5 : f32 to vector<16x1xf32>
    %22 = arith.cmpf oeq, %3, %21 : vector<16x1xf32>
    %23 = vector.shape_cast %22 : vector<16x1xi1> to vector<16x1xi1>
    %24 = vector.broadcast %23 : vector<16x1xi1> to vector<16x2048xi1>
    %25 = vector.shape_cast %5 : vector<1x2048xf32> to vector<1x2048xf32>
    %26 = vector.broadcast %25 : vector<1x2048xf32> to vector<16x2048xf32>
    %27 = arith.select %24, %26, %20 : vector<16x2048xi1>, vector<16x2048xf32>
    %28 = vector.extract_strided_slice %0 {offsets = [1, 0], sizes = [1, 2048], strides = [1, 1]} : vector<3x2048xf32> to vector<1x2048xf32>
    %29 = vector.extract_strided_slice %1 {offsets = [0, 1], sizes = [16, 1], strides = [1, 1]} : vector<16x3xf32> to vector<16x1xf32>
    %30 = arith.mulf %28, %28 : vector<1x2048xf32>
    %31 = arith.mulf %30, %28 : vector<1x2048xf32>
    %cst_6 = arith.constant 1.000000e+00 : f32
    %32 = vector.broadcast %cst_6 : f32 to vector<16x1xf32>
    %33 = arith.cmpf oeq, %29, %32 : vector<16x1xf32>
    %cst_7 = arith.constant 1.000000e+00 : f32
    %34 = vector.shape_cast %33 : vector<16x1xi1> to vector<16x1xi1>
    %35 = vector.broadcast %34 : vector<16x1xi1> to vector<16x2048xi1>
    %36 = vector.shape_cast %28 : vector<1x2048xf32> to vector<1x2048xf32>
    %37 = vector.broadcast %36 : vector<1x2048xf32> to vector<16x2048xf32>
    %38 = vector.broadcast %cst_7 : f32 to vector<16x2048xf32>
    %39 = arith.select %35, %37, %38 : vector<16x2048xi1>, vector<16x2048xf32>
    %cst_8 = arith.constant 2.000000e+00 : f32
    %40 = vector.broadcast %cst_8 : f32 to vector<16x1xf32>
    %41 = arith.cmpf oeq, %29, %40 : vector<16x1xf32>
    %42 = vector.shape_cast %41 : vector<16x1xi1> to vector<16x1xi1>
    %43 = vector.broadcast %42 : vector<16x1xi1> to vector<16x2048xi1>
    %44 = vector.shape_cast %30 : vector<1x2048xf32> to vector<1x2048xf32>
    %45 = vector.broadcast %44 : vector<1x2048xf32> to vector<16x2048xf32>
    %46 = arith.select %43, %45, %39 : vector<16x2048xi1>, vector<16x2048xf32>
    %cst_9 = arith.constant 3.000000e+00 : f32
    %47 = vector.broadcast %cst_9 : f32 to vector<16x1xf32>
    %48 = arith.cmpf oeq, %29, %47 : vector<16x1xf32>
    %49 = vector.shape_cast %48 : vector<16x1xi1> to vector<16x1xi1>
    %50 = vector.broadcast %49 : vector<16x1xi1> to vector<16x2048xi1>
    %51 = vector.shape_cast %31 : vector<1x2048xf32> to vector<1x2048xf32>
    %52 = vector.broadcast %51 : vector<1x2048xf32> to vector<16x2048xf32>
    %53 = arith.select %50, %52, %46 : vector<16x2048xi1>, vector<16x2048xf32>
    %54 = arith.mulf %27, %53 : vector<16x2048xf32>
    %55 = vector.extract_strided_slice %0 {offsets = [2, 0], sizes = [1, 2048], strides = [1, 1]} : vector<3x2048xf32> to vector<1x2048xf32>
    %56 = vector.extract_strided_slice %1 {offsets = [0, 2], sizes = [16, 1], strides = [1, 1]} : vector<16x3xf32> to vector<16x1xf32>
    %57 = arith.mulf %55, %55 : vector<1x2048xf32>
    %58 = arith.mulf %57, %55 : vector<1x2048xf32>
    %cst_10 = arith.constant 1.000000e+00 : f32
    %59 = vector.broadcast %cst_10 : f32 to vector<16x1xf32>
    %60 = arith.cmpf oeq, %56, %59 : vector<16x1xf32>
    %cst_11 = arith.constant 1.000000e+00 : f32
    %61 = vector.shape_cast %60 : vector<16x1xi1> to vector<16x1xi1>
    %62 = vector.broadcast %61 : vector<16x1xi1> to vector<16x2048xi1>
    %63 = vector.shape_cast %55 : vector<1x2048xf32> to vector<1x2048xf32>
    %64 = vector.broadcast %63 : vector<1x2048xf32> to vector<16x2048xf32>
    %65 = vector.broadcast %cst_11 : f32 to vector<16x2048xf32>
    %66 = arith.select %62, %64, %65 : vector<16x2048xi1>, vector<16x2048xf32>
    %cst_12 = arith.constant 2.000000e+00 : f32
    %67 = vector.broadcast %cst_12 : f32 to vector<16x1xf32>
    %68 = arith.cmpf oeq, %56, %67 : vector<16x1xf32>
    %69 = vector.shape_cast %68 : vector<16x1xi1> to vector<16x1xi1>
    %70 = vector.broadcast %69 : vector<16x1xi1> to vector<16x2048xi1>
    %71 = vector.shape_cast %57 : vector<1x2048xf32> to vector<1x2048xf32>
    %72 = vector.broadcast %71 : vector<1x2048xf32> to vector<16x2048xf32>
    %73 = arith.select %70, %72, %66 : vector<16x2048xi1>, vector<16x2048xf32>
    %cst_13 = arith.constant 3.000000e+00 : f32
    %74 = vector.broadcast %cst_13 : f32 to vector<16x1xf32>
    %75 = arith.cmpf oeq, %56, %74 : vector<16x1xf32>
    %76 = vector.shape_cast %75 : vector<16x1xi1> to vector<16x1xi1>
    %77 = vector.broadcast %76 : vector<16x1xi1> to vector<16x2048xi1>
    %78 = vector.shape_cast %58 : vector<1x2048xf32> to vector<1x2048xf32>
    %79 = vector.broadcast %78 : vector<1x2048xf32> to vector<16x2048xf32>
    %80 = arith.select %77, %79, %73 : vector<16x2048xi1>, vector<16x2048xf32>
    %81 = arith.mulf %54, %80 : vector<16x2048xf32>
    %c0_14 = arith.constant 0 : index
    %c0_15 = arith.constant 0 : index
    %82 = vector.load %arg2[%c0_14, %c0_15] : memref<32x16xf32, #tpu.memory_space<vmem>>, vector<32x16xf32>
    %cst_16 = arith.constant dense<0.000000e+00> : vector<32x2048xf32>
    %83 = tpu.matmul %82, %81, %cst_16 {dimension_numbers = #tpu.dot_dimension_numbers<[1], [0], [0], [1], [0, 0, 1, 1], [], []>} : vector<32x16xf32>, vector<16x2048xf32>, vector<32x2048xf32> -> vector<32x2048xf32>
    %c0_17 = arith.constant 0 : index
    %c0_18 = arith.constant 0 : index
    %84 = vector.load %arg4[%c0_17, %c0_18] : memref<32x2048xf32, #tpu.memory_space<vmem>>, vector<32x2048xf32>
    tpu.vector_store %arg4[%c0_17, %c0_18], %83 {strides = array<i32>} : memref<32x2048xf32, #tpu.memory_space<vmem>>, vector<32x2048xf32>,
    return
  }
  func.func @transform_0(%arg0: i32) -> (i32, i32) {
    %c0_i32 = arith.constant 0 : i32
    %c0_i32_0 = arith.constant 0 : i32
    return %c0_i32, %arg0 : i32, i32
  }
  func.func @transform_1(%arg0: i32) -> (i32, i32) {
    %c0_i32 = arith.constant 0 : i32
    %c0_i32_0 = arith.constant 0 : i32
    %c0_i32_1 = arith.constant 0 : i32
    return %c0_i32, %c0_i32_0 : i32, i32
  }
  func.func @transform_2(%arg0: i32) -> (i32, i32) {
    %c0_i32 = arith.constant 0 : i32
    %c0_i32_0 = arith.constant 0 : i32
    %c0_i32_1 = arith.constant 0 : i32
    return %c0_i32, %c0_i32_0 : i32, i32
  }
  func.func @transform_3(%arg0: i32) -> (i32, i32) {
    %c0_i32 = arith.constant 0 : i32
    %c0_i32_0 = arith.constant 0 : i32
    return %c0_i32, %arg0 : i32, i32
  }
}

</mosaic_0001>

<llo_original>
// kernel: tpu_custom_call.1
$region0: #{tpu_custom_call.1}
  #allocation0 [shape = 'u32[]', space=smem, size = 0x4, offset = 0x4, fixed_abs, tag = 'smem constant byte address 0x4 - core index']
  #allocation1 [shape = 'u32[144,128]{1,0:T(1,128)}', space=vmem, size = 0x12000, scoped, tag = 'internal scratch']
  %s0 = inlined_call_operand.hbm [shape: f32[3,4096], index: 0, kind: input, shape index: {}]
  %s1 = inlined_call_operand.vmem [shape: f32[32,16], index: 1, kind: input, shape index: {}]
  %s2 = inlined_call_operand.vmem [shape: f32[16,3], index: 2, kind: input, shape index: {}]
  %s3 = inlined_call_operand.hbm [shape: f32[32,4096], index: 3, kind: output, shape index: {}]
  %s4 = sld [smem:[#allocation0]]
  $region49: #{tpu_custom_call.1} parent=0
    _
  %s6 = ssub.s32 1, %s4
  %s7 = scalar_select 0, %s6, %s4
  $region1: #{tpu_custom_call.1} parent=0
    #allocation2 [shape = 'u8[65536]{0}', space=vmem, size = 0x10000, scoped, tag = 'input window, operand 0']
    #allocation3 [shape = 's32[2]{0}', space=sflag, size = 0x8, scoped, tag = 'scoped memory for tpu_custom_call.1']
    #allocation4 [shape = 's32[2]{0}', space=sflag, size = 0x8, scoped, tag = 'scoped memory for tpu_custom_call.1']
    #allocation5 [shape = 'u8[524288]{0}', space=vmem, size = 0x80000, scoped, tag = 'output window, operand 0']
    %8 = vsyncpa [#allocation3], 0
    %s9 = scalar_lea.sflag [#allocation3], 1
    %10 = vsyncpa %s9, 0
    %11 = vsyncpa [#allocation4], 0
    %s12 = scalar_lea.sflag [#allocation4], 1
    %13 = vsyncpa %s12, 0
    loop: start=0, step=1, limit=4
    $region2: #{tpu_custom_call.1} parent=1 // loop_pre_header
      _
    $region3: #{tpu_custom_call.1} parent=1 // loop_header
      %s15 = sphi 0, %s19
      %p16 = scmp.ge.s32.totalorder %s15, 4
      %s25 = sphi 0, %s27
      %s28 = sphi 0, %s25
      %s29 = sphi 0, %s28
      %s45 = sphi 0, %s29
      %s49 = sphi 0, %s49
      %s51 = sphi 0, %s49
      %s52 = sphi 0, %s51
      %s66 = sphi 0, %s52
      %s70 = sphi 0, %s70
      %s72 = sphi 0, %s70
      %s73 = sphi 0, %s72
      %s87 = sphi 0, %s73
      %s93 = sphi 0, %s95
      %s96 = sphi 0, %s93
      %s97 = sphi 0, %s96
      %s113 = sphi 0, %s97
    $region4: #{tpu_custom_call.1} parent=1 // loop_header_branch
      %18 = sbr.rel (%p16) target = $region8
    $region5: #{tpu_custom_call.1} parent=1 // loop_body
      %s20 = ssub.s32 %s15, 1
      %s21 = ssub.s32 %s15, 2
      %s22 = sadd.s32 %s15, 1
      %s23 = ssub.s32 %s15, %s22
      %p24 = scmp.eq.s32.totalorder %s23, 0
      %s26 = sadd.s32 %s25, 1
      %s27 = scalar_select %p24, %s25, %s26
      %p30 = pneg %p24
      %p31 = scmp.eq.s32.totalorder %s15, 1
      %p32 = por %p30, %p31
      %p33 = scmp.ne.s32.totalorder %s25, %s28
      %p34 = scmp.eq.s32.totalorder %s15, 0
      %p35 = por %p33, %p34
      %p36 = scmp.ne.s32.totalorder %s25, %s28
      %p37 = scmp.eq.s32.totalorder %s20, 1
      %p38 = por %p36, %p37
      %p39 = scmp.ne.s32.totalorder %s28, %s29
      %p40 = scmp.eq.s32.totalorder %s20, 0
      %p41 = por %p39, %p40
      %p42 = scmp.ne.s32.totalorder %s28, %s29
      %p43 = scmp.eq.s32.totalorder %s21, 1
      %p44 = por %p42, %p43
      %p46 = scmp.ne.s32.totalorder %s29, %s45
      %p47 = scmp.eq.s32.totalorder %s21, 0
      %p48 = por %p46, %p47
      %s50 = sadd.s32 %s49, 1
      %p53 = scmp.eq.s32.totalorder %s15, 1
      %p54 = scmp.ne.s32.totalorder %s49, %s51
      %p55 = scmp.eq.s32.totalorder %s15, 0
      %p56 = por %p54, %p55
      %p57 = scmp.ne.s32.totalorder %s49, %s51
      %p58 = scmp.eq.s32.totalorder %s20, 1
      %p59 = por %p57, %p58
      %p60 = scmp.ne.s32.totalorder %s51, %s52
      %p61 = scmp.eq.s32.totalorder %s20, 0
      %p62 = por %p60, %p61
      %p63 = scmp.ne.s32.totalorder %s51, %s52
      %p64 = scmp.eq.s32.totalorder %s21, 1
      %p65 = por %p63, %p64
      %p67 = scmp.ne.s32.totalorder %s52, %s66
      %p68 = scmp.eq.s32.totalorder %s21, 0
      %p69 = por %p67, %p68
      %s71 = sadd.s32 %s70, 1
      %p74 = scmp.eq.s32.totalorder %s15, 1
      %p75 = scmp.ne.s32.totalorder %s70, %s72
      %p76 = scmp.eq.s32.totalorder %s15, 0
      %p77 = por %p75, %p76
      %p78 = scmp.ne.s32.totalorder %s70, %s72
      %p79 = scmp.eq.s32.totalorder %s20, 1
      %p80 = por %p78, %p79
      %p81 = scmp.ne.s32.totalorder %s72, %s73
      %p82 = scmp.eq.s32.totalorder %s20, 0
      %p83 = por %p81, %p82
      %p84 = scmp.ne.s32.totalorder %s72, %s73
      %p85 = scmp.eq.s32.totalorder %s21, 1
      %p86 = por %p84, %p85
      %p88 = scmp.ne.s32.totalorder %s73, %s87
      %p89 = scmp.eq.s32.totalorder %s21, 0
      %p90 = por %p88, %p89
      %s91 = ssub.s32 %s15, %s22
      %p92 = scmp.eq.s32.totalorder %s91, 0
      %s94 = sadd.s32 %s93, 1
      %s95 = scalar_select %p92, %s93, %s94
      %p98 = pneg %p92
      %p99 = scmp.eq.s32.totalorder %s15, 1
      %p100 = por %p98, %p99
      %p101 = scmp.ne.s32.totalorder %s93, %s96
      %p102 = scmp.eq.s32.totalorder %s15, 0
      %p103 = por %p101, %p102
      %p104 = scmp.ne.s32.totalorder %s93, %s96
      %p105 = scmp.eq.s32.totalorder %s20, 1
      %p106 = por %p104, %p105
      %p107 = scmp.ne.s32.totalorder %s96, %s97
      %p108 = scmp.eq.s32.totalorder %s20, 0
      %p109 = por %p107, %p108
      %p110 = scmp.ne.s32.totalorder %s96, %s97
      %p111 = scmp.eq.s32.totalorder %s21, 1
      %p112 = por %p110, %p111
      %p114 = scmp.ne.s32.totalorder %s97, %s113
      %p115 = scmp.eq.s32.totalorder %s21, 0
      %p116 = por %p114, %p115
      %p117 = scmp.le.s32.totalorder 1, %s15
      %p118 = scmp.lt.s32.totalorder %s15, 3
      %p119 = pnand %p117, %p118
      %p120 = pneg %p119
      // Predicated region
      $region9: #{tpu_custom_call.1} parent=5 // pred_check
        _
      $region10: #{tpu_custom_call.1} parent=5 // pred_check_branch
        %122 = sbr.rel (%p119) target = $region12
      $region11: #{tpu_custom_call.1} parent=5 // pred_region
        %s123 = ssub.s32 %s15, 1
        // Predicated region
        $region13: #{tpu_custom_call.1} parent=11 // pred_check
          %p124 = pneg %p62
        $region14: #{tpu_custom_call.1} parent=11 // pred_check_branch
          %126 = sbr.rel (%p124) target = $region16
        $region15: #{tpu_custom_call.1} parent=11 // pred_region
          _
        $region16: #{tpu_custom_call.1} parent=11 // pred_fallthru
          _
        // Predicated region
        $region17: #{tpu_custom_call.1} parent=11 // pred_check
          %p127 = pneg %p83
        $region18: #{tpu_custom_call.1} parent=11 // pred_check_branch
          %129 = sbr.rel (%p127) target = $region20
        $region19: #{tpu_custom_call.1} parent=11 // pred_region
          _
        $region20: #{tpu_custom_call.1} parent=11 // pred_fallthru
          _
      $region12: #{tpu_custom_call.1} parent=5 // pred_fallthru
        _
      %p130 = scmp.lt.s32.totalorder %s15, 2
      // Predicated region
      $region21: #{tpu_custom_call.1} parent=5 // pred_check
        %p131 = pneg %p130
      $region22: #{tpu_custom_call.1} parent=5 // pred_check_branch
        %133 = sbr.rel (%p131) target = $region24
      $region23: #{tpu_custom_call.1} parent=5 // pred_region
        // Predicated region
        $region25: #{tpu_custom_call.1} parent=23 // pred_check
          %p134 = pneg %p35
        $region26: #{tpu_custom_call.1} parent=23 // pred_check_branch
          %136 = sbr.rel (%p134) target = $region28
        $region27: #{tpu_custom_call.1} parent=23 // pred_region
          %s137 = sand.u32 %s25, 1
          %s138 = scalar_lea.sflag [#allocation3], %s137
          %s139 = sand.u32 %s25, 1
          %s140 = smul.addr %s139, 64
          %s141 = scalar_lea.vmem [#allocation2], %s140
          %s142 = smul.u32 16, %s15
          %s144 = ssub.s32 1024, 1024
          %145 = vsyncadd %s138, %s144
          %s146 = smul.addr %s142, 64
          %s147 = scalar_lea.hbm %s0, %s146
          %s149 = sshll.u32 %s141, 4
          %s150 = int_to_ptr.vmem [resolvable:$true] %s149
          %152 = dma.hbm_to_vmem [thread:$0]  %s147, 1024, %s150, %s138
        $region28: #{tpu_custom_call.1} parent=23 // pred_fallthru
          _
      $region24: #{tpu_custom_call.1} parent=5 // pred_fallthru
        _
      %p153 = scmp.le.s32.totalorder 1, %s15
      %p154 = scmp.lt.s32.totalorder %s15, 3
      %p155 = pnand %p153, %p154
      %p156 = pneg %p155
      // Predicated region
      $region29: #{tpu_custom_call.1} parent=5 // pred_check
        _
      $region30: #{tpu_custom_call.1} parent=5 // pred_check_branch
        %158 = sbr.rel (%p155) target = $region32
      $region31: #{tpu_custom_call.1} parent=5 // pred_region
        %s159 = ssub.s32 %s15, 1
        %s160 = sand.u32 %s28, 1
        %s161 = scalar_lea.sflag [#allocation3], %s160
        %s162 = sand.u32 %s28, 1
        %s163 = smul.addr %s162, 64
        %s164 = scalar_lea.vmem [#allocation2], %s163
        // Predicated region
        $region33: #{tpu_custom_call.1} parent=31 // pred_check
          %p165 = pneg %p41
        $region34: #{tpu_custom_call.1} parent=31 // pred_check_branch
          %167 = sbr.rel (%p165) target = $region36
        $region35: #{tpu_custom_call.1} parent=31 // pred_region
          %168 = dma.done %s161, 1024
        $region36: #{tpu_custom_call.1} parent=31 // pred_fallthru
          _
        %s169 = sand.u32 %s28, 1
        %s170 = scalar_lea.sflag [#allocation3], %s169
        %s171 = sand.u32 %s28, 1
        %s172 = smul.addr %s171, 64
        %s173 = scalar_lea.vmem [#allocation2], %s172
        %p174 = pneg %p41
        %p175 = pneg %p38
        %p176 = pneg %p62
        %p177 = pneg %p59
        %p178 = pneg %p83
        %p179 = pneg %p80
        %p180 = pneg %p109
        %p181 = pneg %p106
        %s182 = sand.u32 %s96, 1
        %s183 = scalar_lea.sflag [#allocation4], %s182
        %s184 = sand.u32 %s96, 1
        %s185 = smul.addr %s184, 512
        %s186 = scalar_lea.vmem [#allocation5], %s185
        %s187 = smul.u32 16, %s20
        %s188 = smul.u32 16, %s20
        %v189 = vld [vmem:[%s164] sm:$0x77]
        %v190 = vld [vmem:[%s164 + $0x8] sm:$0x77]
        %v191 = vld [vmem:[%s164 + $0x10] sm:$0x77]
        %v192 = vld [vmem:[%s164 + $0x18] sm:$0x77]
        %v193 = vld [vmem:[%s164 + $0x20] sm:$0x77]
        %v194 = vld [vmem:[%s164 + $0x28] sm:$0x77]
        %v195 = vld [vmem:[%s164 + $0x30] sm:$0x77]
        %v196 = vld [vmem:[%s164 + $0x38] sm:$0x77]
        %v197 = vld [vmem:[%s2] sm:$0xff]
        %v198 = vld [vmem:[%s2 + $0x8] sm:$0xff]
        %v199 = vmul.f32 %v189, %v189
        %v200 = vmul.f32 %v190, %v190
        %v201 = vmul.f32 %v191, %v191
        %v202 = vmul.f32 %v192, %v192
        %v203 = vmul.f32 %v193, %v193
        %v204 = vmul.f32 %v194, %v194
        %v205 = vmul.f32 %v195, %v195
        %v206 = vmul.f32 %v196, %v196
        %v207 = vmul.f32 %v199, %v189
        %v208 = vmul.f32 %v200, %v190
        %v209 = vmul.f32 %v201, %v191
        %v210 = vmul.f32 %v202, %v192
        %v211 = vmul.f32 %v203, %v193
        %v212 = vmul.f32 %v204, %v194
        %v213 = vmul.f32 %v205, %v195
        %v214 = vmul.f32 %v206, %v196
        %vm215 = vcmp.eq.f32.partialorder %v197, 1.0
        %vm216 = vcmp.eq.f32.partialorder %v198, 1.0
        %v217 = vsel %vm215, 1, 0
        %v218 = vsel %vm216, 1, 0
        %219 = vset.pattern.permute.xlu0 0
        %220 = vperm.xlu0 %219, %v217
        %v221 = vpop.permute.xlu0 %220
        %222 = vset.pattern.permute.xlu0 0
        %223 = vperm.xlu0 %222, %v218
        %v224 = vpop.permute.xlu0 %223
        %vm225 = vcmp.eq.s32.totalorder %v221, 1
        %vm226 = vcmp.eq.s32.totalorder %v224, 1
        %v235 = vlaneseq
        %v236 = vshrl.u32 %v235, 7
        %v237 = vsub.s32 0, %v236
        %v238 = vrot.slane %v189, %v237
        %v239 = vlaneseq
        %v240 = vshrl.u32 %v239, 7
        %v241 = vsub.s32 4, %v240
        %v242 = vrot.slane %v189, %v241
        %v243 = vlaneseq
        %v244 = vshrl.u32 %v243, 7
        %v245 = vsub.s32 0, %v244
        %v246 = vrot.slane %v190, %v245
        %v247 = vlaneseq
        %v248 = vshrl.u32 %v247, 7
        %v249 = vsub.s32 4, %v248
        %v250 = vrot.slane %v190, %v249
        %v251 = vlaneseq
        %v252 = vshrl.u32 %v251, 7
        %v253 = vsub.s32 0, %v252
        %v254 = vrot.slane %v191, %v253
        %v255 = vlaneseq
        %v256 = vshrl.u32 %v255, 7
        %v257 = vsub.s32 4, %v256
        %v258 = vrot.slane %v191, %v257
        %v259 = vlaneseq
        %v260 = vshrl.u32 %v259, 7
        %v261 = vsub.s32 0, %v260
        %v262 = vrot.slane %v192, %v261
        %v263 = vlaneseq
        %v264 = vshrl.u32 %v263, 7
        %v265 = vsub.s32 4, %v264
        %v266 = vrot.slane %v192, %v265
        %v267 = vlaneseq
        %v268 = vshrl.u32 %v267, 7
        %v269 = vsub.s32 0, %v268
        %v270 = vrot.slane %v193, %v269
        %v271 = vlaneseq
        %v272 = vshrl.u32 %v271, 7
        %v273 = vsub.s32 4, %v272
        %v274 = vrot.slane %v193, %v273
        %v275 = vlaneseq
        %v276 = vshrl.u32 %v275, 7
        %v277 = vsub.s32 0, %v276
        %v278 = vrot.slane %v194, %v277
        %v279 = vlaneseq
        %v280 = vshrl.u32 %v279, 7
        %v281 = vsub.s32 4, %v280
        %v282 = vrot.slane %v194, %v281
        %v283 = vlaneseq
        %v284 = vshrl.u32 %v283, 7
        %v285 = vsub.s32 0, %v284
        %v286 = vrot.slane %v195, %v285
        %v287 = vlaneseq
        %v288 = vshrl.u32 %v287, 7
        %v289 = vsub.s32 4, %v288
        %v290 = vrot.slane %v195, %v289
        %v291 = vlaneseq
        %v292 = vshrl.u32 %v291, 7
        %v293 = vsub.s32 0, %v292
        %v294 = vrot.slane %v196, %v293
        %v295 = vlaneseq
        %v296 = vshrl.u32 %v295, 7
        %v297 = vsub.s32 4, %v296
        %v298 = vrot.slane %v196, %v297
        %v315 = vlaneseq
        %v316 = vshrl.u32 %v315, 7
        %v317 = vsub.s32 0, %v316
        %v318 = vrot.slane %v238, %v317
        %v319 = vlaneseq
        %v320 = vshrl.u32 %v319, 7
        %v321 = vsub.s32 0, %v320
        %v322 = vrot.slane %v242, %v321
        %v323 = vlaneseq
        %v324 = vshrl.u32 %v323, 7
        %v325 = vsub.s32 0, %v324
        %v326 = vrot.slane %v246, %v325
        %v327 = vlaneseq
        %v328 = vshrl.u32 %v327, 7
        %v329 = vsub.s32 0, %v328
        %v330 = vrot.slane %v250, %v329
        %v331 = vlaneseq
        %v332 = vshrl.u32 %v331, 7
        %v333 = vsub.s32 0, %v332
        %v334 = vrot.slane %v254, %v333
        %v335 = vlaneseq
        %v336 = vshrl.u32 %v335, 7
        %v337 = vsub.s32 0, %v336
        %v338 = vrot.slane %v258, %v337
        %v339 = vlaneseq
        %v340 = vshrl.u32 %v339, 7
        %v341 = vsub.s32 0, %v340
        %v342 = vrot.slane %v262, %v341
        %v343 = vlaneseq
        %v344 = vshrl.u32 %v343, 7
        %v345 = vsub.s32 0, %v344
        %v346 = vrot.slane %v266, %v345
        %v347 = vlaneseq
        %v348 = vshrl.u32 %v347, 7
        %v349 = vsub.s32 0, %v348
        %v350 = vrot.slane %v270, %v349
        %v351 = vlaneseq
        %v352 = vshrl.u32 %v351, 7
        %v353 = vsub.s32 0, %v352
        %v354 = vrot.slane %v274, %v353
        %v355 = vlaneseq
        %v356 = vshrl.u32 %v355, 7
        %v357 = vsub.s32 0, %v356
        %v358 = vrot.slane %v278, %v357
        %v359 = vlaneseq
        %v360 = vshrl.u32 %v359, 7
        %v361 = vsub.s32 0, %v360
        %v362 = vrot.slane %v282, %v361
        %v363 = vlaneseq
        %v364 = vshrl.u32 %v363, 7
        %v365 = vsub.s32 0, %v364
        %v366 = vrot.slane %v286, %v365
        %v367 = vlaneseq
        %v368 = vshrl.u32 %v367, 7
        %v369 = vsub.s32 0, %v368
        %v370 = vrot.slane %v290, %v369
        %v371 = vlaneseq
        %v372 = vshrl.u32 %v371, 7
        %v373 = vsub.s32 0, %v372
        %v374 = vrot.slane %v294, %v373
        %v375 = vlaneseq
        %v376 = vshrl.u32 %v375, 7
        %v377 = vsub.s32 0, %v376
        %v378 = vrot.slane %v298, %v377
        %v379 = vsel %vm225, %v318, 1.0
        %v380 = vsel %vm225, %v322, 1.0
        %v381 = vsel %vm225, %v326, 1.0
        %v382 = vsel %vm225, %v330, 1.0
        %v383 = vsel %vm225, %v334, 1.0
        %v384 = vsel %vm225, %v338, 1.0
        %v385 = vsel %vm225, %v342, 1.0
        %v386 = vsel %vm225, %v346, 1.0
        %v387 = vsel %vm225, %v350, 1.0
        %v388 = vsel %vm225, %v354, 1.0
        %v389 = vsel %vm225, %v358, 1.0
        %v390 = vsel %vm225, %v362, 1.0
        %v391 = vsel %vm225, %v366, 1.0
        %v392 = vsel %vm225, %v370, 1.0
        %v393 = vsel %vm225, %v374, 1.0
        %v394 = vsel %vm225, %v378, 1.0
        %v395 = vsel %vm226, %v318, 1.0
        %v396 = vsel %vm226, %v322, 1.0
        %v397 = vsel %vm226, %v326, 1.0
        %v398 = vsel %vm226, %v330, 1.0
        %v399 = vsel %vm226, %v334, 1.0
        %v400 = vsel %vm226, %v338, 1.0
        %v401 = vsel %vm226, %v342, 1.0
        %v402 = vsel %vm226, %v346, 1.0
        %v403 = vsel %vm226, %v350, 1.0
        %v404 = vsel %vm226, %v354, 1.0
        %v405 = vsel %vm226, %v358, 1.0
        %v406 = vsel %vm226, %v362, 1.0
        %v407 = vsel %vm226, %v366, 1.0
        %v408 = vsel %vm226, %v370, 1.0
        %v409 = vsel %vm226, %v374, 1.0
        %v410 = vsel %vm226, %v378, 1.0
        %vm411 = vcmp.eq.f32.partialorder %v197, 2.0
        %vm412 = vcmp.eq.f32.partialorder %v198, 2.0
        %v413 = vsel %vm411, 1, 0
        %v414 = vsel %vm412, 1, 0
        %415 = vset.pattern.permute.xlu0 0
        %416 = vperm.xlu0 %415, %v413
        %v417 = vpop.permute.xlu0 %416
        %418 = vset.pattern.permute.xlu0 0
        %419 = vperm.xlu0 %418, %v414
        %v420 = vpop.permute.xlu0 %419
        %vm421 = vcmp.eq.s32.totalorder %v417, 1
        %vm422 = vcmp.eq.s32.totalorder %v420, 1
        %v431 = vlaneseq
        %v432 = vshrl.u32 %v431, 7
        %v433 = vsub.s32 0, %v432
        %v434 = vrot.slane %v199, %v433
        %v435 = vlaneseq
        %v436 = vshrl.u32 %v435, 7
        %v437 = vsub.s32 4, %v436
        %v438 = vrot.slane %v199, %v437
        %v439 = vlaneseq
        %v440 = vshrl.u32 %v439, 7
        %v441 = vsub.s32 0, %v440
        %v442 = vrot.slane %v200, %v441
        %v443 = vlaneseq
        %v444 = vshrl.u32 %v443, 7
        %v445 = vsub.s32 4, %v444
        %v446 = vrot.slane %v200, %v445
        %v447 = vlaneseq
        %v448 = vshrl.u32 %v447, 7
        %v449 = vsub.s32 0, %v448
        %v450 = vrot.slane %v201, %v449
        %v451 = vlaneseq
        %v452 = vshrl.u32 %v451, 7
        %v453 = vsub.s32 4, %v452
        %v454 = vrot.slane %v201, %v453
        %v455 = vlaneseq
        %v456 = vshrl.u32 %v455, 7
        %v457 = vsub.s32 0, %v456
        %v458 = vrot.slane %v202, %v457
        %v459 = vlaneseq
        %v460 = vshrl.u32 %v459, 7
        %v461 = vsub.s32 4, %v460
        %v462 = vrot.slane %v202, %v461
        %v463 = vlaneseq
        %v464 = vshrl.u32 %v463, 7
        %v465 = vsub.s32 0, %v464
        %v466 = vrot.slane %v203, %v465
        %v467 = vlaneseq
        %v468 = vshrl.u32 %v467, 7
        %v469 = vsub.s32 4, %v468
        %v470 = vrot.slane %v203, %v469
        %v471 = vlaneseq
        %v472 = vshrl.u32 %v471, 7
        %v473 = vsub.s32 0, %v472
        %v474 = vrot.slane %v204, %v473
        %v475 = vlaneseq
        %v476 = vshrl.u32 %v475, 7
        %v477 = vsub.s32 4, %v476
        %v478 = vrot.slane %v204, %v477
        %v479 = vlaneseq
        %v480 = vshrl.u32 %v479, 7
        %v481 = vsub.s32 0, %v480
        %v482 = vrot.slane %v205, %v481
        %v483 = vlaneseq
        %v484 = vshrl.u32 %v483, 7
        %v485 = vsub.s32 4, %v484
        %v486 = vrot.slane %v205, %v485
        %v487 = vlaneseq
        %v488 = vshrl.u32 %v487, 7
        %v489 = vsub.s32 0, %v488
        %v490 = vrot.slane %v206, %v489
        %v491 = vlaneseq
        %v492 = vshrl.u32 %v491, 7
        %v493 = vsub.s32 4, %v492
        %v494 = vrot.slane %v206, %v493
        %v511 = vlaneseq
        %v512 = vshrl.u32 %v511, 7
        %v513 = vsub.s32 0, %v512
        %v514 = vrot.slane %v434, %v513
        %v515 = vlaneseq
        %v516 = vshrl.u32 %v515, 7
        %v517 = vsub.s32 0, %v516
        %v518 = vrot.slane %v438, %v517
        %v519 = vlaneseq
        %v520 = vshrl.u32 %v519, 7
        %v521 = vsub.s32 0, %v520
        %v522 = vrot.slane %v442, %v521
        %v523 = vlaneseq
        %v524 = vshrl.u32 %v523, 7
        %v525 = vsub.s32 0, %v524
        %v526 = vrot.slane %v446, %v525
        %v527 = vlaneseq
        %v528 = vshrl.u32 %v527, 7
        %v529 = vsub.s32 0, %v528
        %v530 = vrot.slane %v450, %v529
        %v531 = vlaneseq
        %v532 = vshrl.u32 %v531, 7
        %v533 = vsub.s32 0, %v532
        %v534 = vrot.slane %v454, %v533
        %v535 = vlaneseq
        %v536 = vshrl.u32 %v535, 7
        %v537 = vsub.s32 0, %v536
        %v538 = vrot.slane %v458, %v537
        %v539 = vlaneseq
        %v540 = vshrl.u32 %v539, 7
        %v541 = vsub.s32 0, %v540
        %v542 = vrot.slane %v462, %v541
        %v543 = vlaneseq
        %v544 = vshrl.u32 %v543, 7
        %v545 = vsub.s32 0, %v544
        %v546 = vrot.slane %v466, %v545
        %v547 = vlaneseq
        %v548 = vshrl.u32 %v547, 7
        %v549 = vsub.s32 0, %v548
        %v550 = vrot.slane %v470, %v549
        %v551 = vlaneseq
        %v552 = vshrl.u32 %v551, 7
        %v553 = vsub.s32 0, %v552
        %v554 = vrot.slane %v474, %v553
        %v555 = vlaneseq
        %v556 = vshrl.u32 %v555, 7
        %v557 = vsub.s32 0, %v556
        %v558 = vrot.slane %v478, %v557
        %v559 = vlaneseq
        %v560 = vshrl.u32 %v559, 7
        %v561 = vsub.s32 0, %v560
        %v562 = vrot.slane %v482, %v561
        %v563 = vlaneseq
        %v564 = vshrl.u32 %v563, 7
        %v565 = vsub.s32 0, %v564
        %v566 = vrot.slane %v486, %v565
        %v567 = vlaneseq
        %v568 = vshrl.u32 %v567, 7
        %v569 = vsub.s32 0, %v568
        %v570 = vrot.slane %v490, %v569
        %v571 = vlaneseq
        %v572 = vshrl.u32 %v571, 7
        %v573 = vsub.s32 0, %v572
        %v574 = vrot.slane %v494, %v573
        %v575 = vsel %vm421, %v514, %v379
        %v576 = vsel %vm421, %v518, %v380
        %v577 = vsel %vm421, %v522, %v381
        %v578 = vsel %vm421, %v526, %v382
        %v579 = vsel %vm421, %v530, %v383
        %v580 = vsel %vm421, %v534, %v384
        %v581 = vsel %vm421, %v538, %v385
        %v582 = vsel %vm421, %v542, %v386
        %v583 = vsel %vm421, %v546, %v387
        %v584 = vsel %vm421, %v550, %v388
        %v585 = vsel %vm421, %v554, %v389
        %v586 = vsel %vm421, %v558, %v390
        %v587 = vsel %vm421, %v562, %v391
        %v588 = vsel %vm421, %v566, %v392
        %v589 = vsel %vm421, %v570, %v393
        %v590 = vsel %vm421, %v574, %v394
        %v591 = vsel %vm422, %v514, %v395
        %v592 = vsel %vm422, %v518, %v396
        %v593 = vsel %vm422, %v522, %v397
        %v594 = vsel %vm422, %v526, %v398
        %v595 = vsel %vm422, %v530, %v399
        %v596 = vsel %vm422, %v534, %v400
        %v597 = vsel %vm422, %v538, %v401
        %v598 = vsel %vm422, %v542, %v402
        %v599 = vsel %vm422, %v546, %v403
        %v600 = vsel %vm422, %v550, %v404
        %v601 = vsel %vm422, %v554, %v405
        %v602 = vsel %vm422, %v558, %v406
        %v603 = vsel %vm422, %v562, %v407
        %v604 = vsel %vm422, %v566, %v408
        %v605 = vsel %vm422, %v570, %v409
        %v606 = vsel %vm422, %v574, %v410
        %vm607 = vcmp.eq.f32.partialorder %v197, 3.0
        %vm608 = vcmp.eq.f32.partialorder %v198, 3.0
        %v609 = vsel %vm607, 1, 0
        %v610 = vsel %vm608, 1, 0
        %611 = vset.pattern.permute.xlu0 0
        %612 = vperm.xlu0 %611, %v609
        %v613 = vpop.permute.xlu0 %612
        %614 = vset.pattern.permute.xlu0 0
        %615 = vperm.xlu0 %614, %v610
        %v616 = vpop.permute.xlu0 %615
        %vm617 = vcmp.eq.s32.totalorder %v613, 1
        %vm618 = vcmp.eq.s32.totalorder %v616, 1
        %v627 = vlaneseq
        %v628 = vshrl.u32 %v627, 7
        %v629 = vsub.s32 0, %v628
        %v630 = vrot.slane %v207, %v629
        %v631 = vlaneseq
        %v632 = vshrl.u32 %v631, 7
        %v633 = vsub.s32 4, %v632
        %v634 = vrot.slane %v207, %v633
        %v635 = vlaneseq
        %v636 = vshrl.u32 %v635, 7
        %v637 = vsub.s32 0, %v636
        %v638 = vrot.slane %v208, %v637
        %v639 = vlaneseq
        %v640 = vshrl.u32 %v639, 7
        %v641 = vsub.s32 4, %v640
        %v642 = vrot.slane %v208, %v641
        %v643 = vlaneseq
        %v644 = vshrl.u32 %v643, 7
        %v645 = vsub.s32 0, %v644
        %v646 = vrot.slane %v209, %v645
        %v647 = vlaneseq
        %v648 = vshrl.u32 %v647, 7
        %v649 = vsub.s32 4, %v648
        %v650 = vrot.slane %v209, %v649
        %v651 = vlaneseq
        %v652 = vshrl.u32 %v651, 7
        %v653 = vsub.s32 0, %v652
        %v654 = vrot.slane %v210, %v653
        %v655 = vlaneseq
        %v656 = vshrl.u32 %v655, 7
        %v657 = vsub.s32 4, %v656
        %v658 = vrot.slane %v210, %v657
        %v659 = vlaneseq
        %v660 = vshrl.u32 %v659, 7
        %v661 = vsub.s32 0, %v660
        %v662 = vrot.slane %v211, %v661
        %v663 = vlaneseq
        %v664 = vshrl.u32 %v663, 7
        %v665 = vsub.s32 4, %v664
        %v666 = vrot.slane %v211, %v665
        %v667 = vlaneseq
        %v668 = vshrl.u32 %v667, 7
        %v669 = vsub.s32 0, %v668
        %v670 = vrot.slane %v212, %v669
        %v671 = vlaneseq
        %v672 = vshrl.u32 %v671, 7
        %v673 = vsub.s32 4, %v672
        %v674 = vrot.slane %v212, %v673
        %v675 = vlaneseq
        %v676 = vshrl.u32 %v675, 7
        %v677 = vsub.s32 0, %v676
        %v678 = vrot.slane %v213, %v677
        %v679 = vlaneseq
        %v680 = vshrl.u32 %v679, 7
        %v681 = vsub.s32 4, %v680
        %v682 = vrot.slane %v213, %v681
        %v683 = vlaneseq
        %v684 = vshrl.u32 %v683, 7
        %v685 = vsub.s32 0, %v684
        %v686 = vrot.slane %v214, %v685
        %v687 = vlaneseq
        %v688 = vshrl.u32 %v687, 7
        %v689 = vsub.s32 4, %v688
        %v690 = vrot.slane %v214, %v689
        %v707 = vlaneseq
        %v708 = vshrl.u32 %v707, 7
        %v709 = vsub.s32 0, %v708
        %v710 = vrot.slane %v630, %v709
        %v711 = vlaneseq
        %v712 = vshrl.u32 %v711, 7
        %v713 = vsub.s32 0, %v712
        %v714 = vrot.slane %v634, %v713
        %v715 = vlaneseq
        %v716 = vshrl.u32 %v715, 7
        %v717 = vsub.s32 0, %v716
        %v718 = vrot.slane %v638, %v717
        %v719 = vlaneseq
        %v720 = vshrl.u32 %v719, 7
        %v721 = vsub.s32 0, %v720
        %v722 = vrot.slane %v642, %v721
        %v723 = vlaneseq
        %v724 = vshrl.u32 %v723, 7
        %v725 = vsub.s32 0, %v724
        %v726 = vrot.slane %v646, %v725
        %v727 = vlaneseq
        %v728 = vshrl.u32 %v727, 7
        %v729 = vsub.s32 0, %v728
        %v730 = vrot.slane %v650, %v729
        %v731 = vlaneseq
        %v732 = vshrl.u32 %v731, 7
        %v733 = vsub.s32 0, %v732
        %v734 = vrot.slane %v654, %v733
        %v735 = vlaneseq
        %v736 = vshrl.u32 %v735, 7
        %v737 = vsub.s32 0, %v736
        %v738 = vrot.slane %v658, %v737
        %v739 = vlaneseq
        %v740 = vshrl.u32 %v739, 7
        %v741 = vsub.s32 0, %v740
        %v742 = vrot.slane %v662, %v741
        %v743 = vlaneseq
        %v744 = vshrl.u32 %v743, 7
        %v745 = vsub.s32 0, %v744
        %v746 = vrot.slane %v666, %v745
        %v747 = vlaneseq
        %v748 = vshrl.u32 %v747, 7
        %v749 = vsub.s32 0, %v748
        %v750 = vrot.slane %v670, %v749
        %v751 = vlaneseq
        %v752 = vshrl.u32 %v751, 7
        %v753 = vsub.s32 0, %v752
        %v754 = vrot.slane %v674, %v753
        %v755 = vlaneseq
        %v756 = vshrl.u32 %v755, 7
        %v757 = vsub.s32 0, %v756
        %v758 = vrot.slane %v678, %v757
        %v759 = vlaneseq
        %v760 = vshrl.u32 %v759, 7
        %v761 = vsub.s32 0, %v760
        %v762 = vrot.slane %v682, %v761
        %v763 = vlaneseq
        %v764 = vshrl.u32 %v763, 7
        %v765 = vsub.s32 0, %v764
        %v766 = vrot.slane %v686, %v765
        %v767 = vlaneseq
        %v768 = vshrl.u32 %v767, 7
        %v769 = vsub.s32 0, %v768
        %v770 = vrot.slane %v690, %v769
        %v771 = vsel %vm617, %v710, %v575
        %v772 = vsel %vm617, %v714, %v576
        %v773 = vsel %vm617, %v718, %v577
        %v774 = vsel %vm617, %v722, %v578
        %v775 = vsel %vm617, %v726, %v579
        %v776 = vsel %vm617, %v730, %v580
        %v777 = vsel %vm617, %v734, %v581
        %v778 = vsel %vm617, %v738, %v582
        %v779 = vsel %vm617, %v742, %v583
        %v780 = vsel %vm617, %v746, %v584
        %v781 = vsel %vm617, %v750, %v585
        %v782 = vsel %vm617, %v754, %v586
        %v783 = vsel %vm617, %v758, %v587
        %v784 = vsel %vm617, %v762, %v588
        %v785 = vsel %vm617, %v766, %v589
        %v786 = vsel %vm617, %v770, %v590
        %v787 = vsel %vm618, %v710, %v591
        %v788 = vsel %vm618, %v714, %v592
        %v789 = vsel %vm618, %v718, %v593
        %v790 = vsel %vm618, %v722, %v594
        %v791 = vsel %vm618, %v726, %v595
        %v792 = vsel %vm618, %v730, %v596
        %v793 = vsel %vm618, %v734, %v597
        %v794 = vsel %vm618, %v738, %v598
        %v795 = vsel %vm618, %v742, %v599
        %v796 = vsel %vm618, %v746, %v600
        %v797 = vsel %vm618, %v750, %v601
        %v798 = vsel %vm618, %v754, %v602
        %v799 = vsel %vm618, %v758, %v603
        %v800 = vsel %vm618, %v762, %v604
        %v801 = vsel %vm618, %v766, %v605
        %v802 = vsel %vm618, %v770, %v606
        %803 = vset.pattern.permute.xlu0 1
        %804 = vperm.xlu0 %803, %v217
        %v805 = vpop.permute.xlu0 %804
        %806 = vset.pattern.permute.xlu0 1
        %807 = vperm.xlu0 %806, %v218
        %v808 = vpop.permute.xlu0 %807
        %vm809 = vcmp.eq.s32.totalorder %v805, 1
        %vm810 = vcmp.eq.s32.totalorder %v808, 1
        %v811 = vlaneseq
        %v812 = vshrl.u32 %v811, 7
        %v813 = vsub.s32 1, %v812
        %v814 = vrot.slane %v189, %v813
        %v815 = vlaneseq
        %v816 = vshrl.u32 %v815, 7
        %v817 = vsub.s32 5, %v816
        %v818 = vrot.slane %v189, %v817
        %v819 = vlaneseq
        %v820 = vshrl.u32 %v819, 7
        %v821 = vsub.s32 1, %v820
        %v822 = vrot.slane %v190, %v821
        %v823 = vlaneseq
        %v824 = vshrl.u32 %v823, 7
        %v825 = vsub.s32 5, %v824
        %v826 = vrot.slane %v190, %v825
        %v827 = vlaneseq
        %v828 = vshrl.u32 %v827, 7
        %v829 = vsub.s32 1, %v828
        %v830 = vrot.slane %v191, %v829
        %v831 = vlaneseq
        %v832 = vshrl.u32 %v831, 7
        %v833 = vsub.s32 5, %v832
        %v834 = vrot.slane %v191, %v833
        %v835 = vlaneseq
        %v836 = vshrl.u32 %v835, 7
        %v837 = vsub.s32 1, %v836
        %v838 = vrot.slane %v192, %v837
        %v839 = vlaneseq
        %v840 = vshrl.u32 %v839, 7
        %v841 = vsub.s32 5, %v840
        %v842 = vrot.slane %v192, %v841
        %v843 = vlaneseq
        %v844 = vshrl.u32 %v843, 7
        %v845 = vsub.s32 1, %v844
        %v846 = vrot.slane %v193, %v845
        %v847 = vlaneseq
        %v848 = vshrl.u32 %v847, 7
        %v849 = vsub.s32 5, %v848
        %v850 = vrot.slane %v193, %v849
        %v851 = vlaneseq
        %v852 = vshrl.u32 %v851, 7
        %v853 = vsub.s32 1, %v852
        %v854 = vrot.slane %v194, %v853
        %v855 = vlaneseq
        %v856 = vshrl.u32 %v855, 7
        %v857 = vsub.s32 5, %v856
        %v858 = vrot.slane %v194, %v857
        %v859 = vlaneseq
        %v860 = vshrl.u32 %v859, 7
        %v861 = vsub.s32 1, %v860
        %v862 = vrot.slane %v195, %v861
        %v863 = vlaneseq
        %v864 = vshrl.u32 %v863, 7
        %v865 = vsub.s32 5, %v864
        %v866 = vrot.slane %v195, %v865
        %v867 = vlaneseq
        %v868 = vshrl.u32 %v867, 7
        %v869 = vsub.s32 1, %v868
        %v870 = vrot.slane %v196, %v869
        %v871 = vlaneseq
        %v872 = vshrl.u32 %v871, 7
        %v873 = vsub.s32 5, %v872
        %v874 = vrot.slane %v196, %v873
        %v891 = vlaneseq
        %v892 = vshrl.u32 %v891, 7
        %v893 = vsub.s32 1, %v892
        %v894 = vrot.slane %v814, %v893
        %v895 = vlaneseq
        %v896 = vshrl.u32 %v895, 7
        %v897 = vsub.s32 1, %v896
        %v898 = vrot.slane %v818, %v897
        %v899 = vlaneseq
        %v900 = vshrl.u32 %v899, 7
        %v901 = vsub.s32 1, %v900
        %v902 = vrot.slane %v822, %v901
        %v903 = vlaneseq
        %v904 = vshrl.u32 %v903, 7
        %v905 = vsub.s32 1, %v904
        %v906 = vrot.slane %v826, %v905
        %v907 = vlaneseq
        %v908 = vshrl.u32 %v907, 7
        %v909 = vsub.s32 1, %v908
        %v910 = vrot.slane %v830, %v909
        %v911 = vlaneseq
        %v912 = vshrl.u32 %v911, 7
        %v913 = vsub.s32 1, %v912
        %v914 = vrot.slane %v834, %v913
        %v915 = vlaneseq
        %v916 = vshrl.u32 %v915, 7
        %v917 = vsub.s32 1, %v916
        %v918 = vrot.slane %v838, %v917
        %v919 = vlaneseq
        %v920 = vshrl.u32 %v919, 7
        %v921 = vsub.s32 1, %v920
        %v922 = vrot.slane %v842, %v921
        %v923 = vlaneseq
        %v924 = vshrl.u32 %v923, 7
        %v925 = vsub.s32 1, %v924
        %v926 = vrot.slane %v846, %v925
        %v927 = vlaneseq
        %v928 = vshrl.u32 %v927, 7
        %v929 = vsub.s32 1, %v928
        %v930 = vrot.slane %v850, %v929
        %v931 = vlaneseq
        %v932 = vshrl.u32 %v931, 7
        %v933 = vsub.s32 1, %v932
        %v934 = vrot.slane %v854, %v933
        %v935 = vlaneseq
        %v936 = vshrl.u32 %v935, 7
        %v937 = vsub.s32 1, %v936
        %v938 = vrot.slane %v858, %v937
        %v939 = vlaneseq
        %v940 = vshrl.u32 %v939, 7
        %v941 = vsub.s32 1, %v940
        %v942 = vrot.slane %v862, %v941
        %v943 = vlaneseq
        %v944 = vshrl.u32 %v943, 7
        %v945 = vsub.s32 1, %v944
        %v946 = vrot.slane %v866, %v945
        %v947 = vlaneseq
        %v948 = vshrl.u32 %v947, 7
        %v949 = vsub.s32 1, %v948
        %v950 = vrot.slane %v870, %v949
        %v951 = vlaneseq
        %v952 = vshrl.u32 %v951, 7
        %v953 = vsub.s32 1, %v952
        %v954 = vrot.slane %v874, %v953
        %v955 = vsel %vm809, %v894, 1.0
        %v956 = vsel %vm809, %v898, 1.0
        %v957 = vsel %vm809, %v902, 1.0
        %v958 = vsel %vm809, %v906, 1.0
        %v959 = vsel %vm809, %v910, 1.0
        %v960 = vsel %vm809, %v914, 1.0
        %v961 = vsel %vm809, %v918, 1.0
        %v962 = vsel %vm809, %v922, 1.0
        %v963 = vsel %vm809, %v926, 1.0
        %v964 = vsel %vm809, %v930, 1.0
        %v965 = vsel %vm809, %v934, 1.0
        %v966 = vsel %vm809, %v938, 1.0
        %v967 = vsel %vm809, %v942, 1.0
        %v968 = vsel %vm809, %v946, 1.0
        %v969 = vsel %vm809, %v950, 1.0
        %v970 = vsel %vm809, %v954, 1.0
        %v971 = vsel %vm810, %v894, 1.0
        %v972 = vsel %vm810, %v898, 1.0
        %v973 = vsel %vm810, %v902, 1.0
        %v974 = vsel %vm810, %v906, 1.0
        %v975 = vsel %vm810, %v910, 1.0
        %v976 = vsel %vm810, %v914, 1.0
        %v977 = vsel %vm810, %v918, 1.0
        %v978 = vsel %vm810, %v922, 1.0
        %v979 = vsel %vm810, %v926, 1.0
        %v980 = vsel %vm810, %v930, 1.0
        %v981 = vsel %vm810, %v934, 1.0
        %v982 = vsel %vm810, %v938, 1.0
        %v983 = vsel %vm810, %v942, 1.0
        %v984 = vsel %vm810, %v946, 1.0
        %v985 = vsel %vm810, %v950, 1.0
        %v986 = vsel %vm810, %v954, 1.0
        %987 = vset.pattern.permute.xlu0 1
        %988 = vperm.xlu0 %987, %v413
        %v989 = vpop.permute.xlu0 %988
        %990 = vset.pattern.permute.xlu0 1
        %991 = vperm.xlu0 %990, %v414
        %v992 = vpop.permute.xlu0 %991
        %vm993 = vcmp.eq.s32.totalorder %v989, 1
        %vm994 = vcmp.eq.s32.totalorder %v992, 1
        %v995 = vlaneseq
        %v996 = vshrl.u32 %v995, 7
        %v997 = vsub.s32 1, %v996
        %v998 = vrot.slane %v199, %v997
        %v999 = vlaneseq
        %v1000 = vshrl.u32 %v999, 7
        %v1001 = vsub.s32 5, %v1000
        %v1002 = vrot.slane %v199, %v1001
        %v1003 = vlaneseq
        %v1004 = vshrl.u32 %v1003, 7
        %v1005 = vsub.s32 1, %v1004
        %v1006 = vrot.slane %v200, %v1005
        %v1007 = vlaneseq
        %v1008 = vshrl.u32 %v1007, 7
        %v1009 = vsub.s32 5, %v1008
        %v1010 = vrot.slane %v200, %v1009
        %v1011 = vlaneseq
        %v1012 = vshrl.u32 %v1011, 7
        %v1013 = vsub.s32 1, %v1012
        %v1014 = vrot.slane %v201, %v1013
        %v1015 = vlaneseq
        %v1016 = vshrl.u32 %v1015, 7
        %v1017 = vsub.s32 5, %v1016
        %v1018 = vrot.slane %v201, %v1017
        %v1019 = vlaneseq
        %v1020 = vshrl.u32 %v1019, 7
        %v1021 = vsub.s32 1, %v1020
        %v1022 = vrot.slane %v202, %v1021
        %v1023 = vlaneseq
        %v1024 = vshrl.u32 %v1023, 7
        %v1025 = vsub.s32 5, %v1024
        %v1026 = vrot.slane %v202, %v1025
        %v1027 = vlaneseq
        %v1028 = vshrl.u32 %v1027, 7
        %v1029 = vsub.s32 1, %v1028
        %v1030 = vrot.slane %v203, %v1029
        %v1031 = vlaneseq
        %v1032 = vshrl.u32 %v1031, 7
        %v1033 = vsub.s32 5, %v1032
        %v1034 = vrot.slane %v203, %v1033
        %v1035 = vlaneseq
        %v1036 = vshrl.u32 %v1035, 7
        %v1037 = vsub.s32 1, %v1036
        %v1038 = vrot.slane %v204, %v1037
        %v1039 = vlaneseq
        %v1040 = vshrl.u32 %v1039, 7
        %v1041 = vsub.s32 5, %v1040
        %v1042 = vrot.slane %v204, %v1041
        %v1043 = vlaneseq
        %v1044 = vshrl.u32 %v1043, 7
        %v1045 = vsub.s32 1, %v1044
        %v1046 = vrot.slane %v205, %v1045
        %v1047 = vlaneseq
        %v1048 = vshrl.u32 %v1047, 7
        %v1049 = vsub.s32 5, %v1048
        %v1050 = vrot.slane %v205, %v1049
        %v1051 = vlaneseq
        %v1052 = vshrl.u32 %v1051, 7
        %v1053 = vsub.s32 1, %v1052
        %v1054 = vrot.slane %v206, %v1053
        %v1055 = vlaneseq
        %v1056 = vshrl.u32 %v1055, 7
        %v1057 = vsub.s32 5, %v1056
        %v1058 = vrot.slane %v206, %v1057
        %v1075 = vlaneseq
        %v1076 = vshrl.u32 %v1075, 7
        %v1077 = vsub.s32 1, %v1076
        %v1078 = vrot.slane %v998, %v1077
        %v1079 = vlaneseq
        %v1080 = vshrl.u32 %v1079, 7
        %v1081 = vsub.s32 1, %v1080
        %v1082 = vrot.slane %v1002, %v1081
        %v1083 = vlaneseq
        %v1084 = vshrl.u32 %v1083, 7
        %v1085 = vsub.s32 1, %v1084
        %v1086 = vrot.slane %v1006, %v1085
        %v1087 = vlaneseq
        %v1088 = vshrl.u32 %v1087, 7
        %v1089 = vsub.s32 1, %v1088
        %v1090 = vrot.slane %v1010, %v1089
        %v1091 = vlaneseq
        %v1092 = vshrl.u32 %v1091, 7
        %v1093 = vsub.s32 1, %v1092
        %v1094 = vrot.slane %v1014, %v1093
        %v1095 = vlaneseq
        %v1096 = vshrl.u32 %v1095, 7
        %v1097 = vsub.s32 1, %v1096
        %v1098 = vrot.slane %v1018, %v1097
        %v1099 = vlaneseq
        %v1100 = vshrl.u32 %v1099, 7
        %v1101 = vsub.s32 1, %v1100
        %v1102 = vrot.slane %v1022, %v1101
        %v1103 = vlaneseq
        %v1104 = vshrl.u32 %v1103, 7
        %v1105 = vsub.s32 1, %v1104
        %v1106 = vrot.slane %v1026, %v1105
        %v1107 = vlaneseq
        %v1108 = vshrl.u32 %v1107, 7
        %v1109 = vsub.s32 1, %v1108
        %v1110 = vrot.slane %v1030, %v1109
        %v1111 = vlaneseq
        %v1112 = vshrl.u32 %v1111, 7
        %v1113 = vsub.s32 1, %v1112
        %v1114 = vrot.slane %v1034, %v1113
        %v1115 = vlaneseq
        %v1116 = vshrl.u32 %v1115, 7
        %v1117 = vsub.s32 1, %v1116
        %v1118 = vrot.slane %v1038, %v1117
        %v1119 = vlaneseq
        %v1120 = vshrl.u32 %v1119, 7
        %v1121 = vsub.s32 1, %v1120
        %v1122 = vrot.slane %v1042, %v1121
        %v1123 = vlaneseq
        %v1124 = vshrl.u32 %v1123, 7
        %v1125 = vsub.s32 1, %v1124
        %v1126 = vrot.slane %v1046, %v1125
        %v1127 = vlaneseq
        %v1128 = vshrl.u32 %v1127, 7
        %v1129 = vsub.s32 1, %v1128
        %v1130 = vrot.slane %v1050, %v1129
        %v1131 = vlaneseq
        %v1132 = vshrl.u32 %v1131, 7
        %v1133 = vsub.s32 1, %v1132
        %v1134 = vrot.slane %v1054, %v1133
        %v1135 = vlaneseq
        %v1136 = vshrl.u32 %v1135, 7
        %v1137 = vsub.s32 1, %v1136
        %v1138 = vrot.slane %v1058, %v1137
        %v1139 = vsel %vm993, %v1078, %v955
        %v1140 = vsel %vm993, %v1082, %v956
        %v1141 = vsel %vm993, %v1086, %v957
        %v1142 = vsel %vm993, %v1090, %v958
        %v1143 = vsel %vm993, %v1094, %v959
        %v1144 = vsel %vm993, %v1098, %v960
        %v1145 = vsel %vm993, %v1102, %v961
        %v1146 = vsel %vm993, %v1106, %v962
        %v1147 = vsel %vm993, %v1110, %v963
        %v1148 = vsel %vm993, %v1114, %v964
        %v1149 = vsel %vm993, %v1118, %v965
        %v1150 = vsel %vm993, %v1122, %v966
        %v1151 = vsel %vm993, %v1126, %v967
        %v1152 = vsel %vm993, %v1130, %v968
        %v1153 = vsel %vm993, %v1134, %v969
        %v1154 = vsel %vm993, %v1138, %v970
        %v1155 = vsel %vm994, %v1078, %v971
        %v1156 = vsel %vm994, %v1082, %v972
        %v1157 = vsel %vm994, %v1086, %v973
        %v1158 = vsel %vm994, %v1090, %v974
        %v1159 = vsel %vm994, %v1094, %v975
        %v1160 = vsel %vm994, %v1098, %v976
        %v1161 = vsel %vm994, %v1102, %v977
        %v1162 = vsel %vm994, %v1106, %v978
        %v1163 = vsel %vm994, %v1110, %v979
        %v1164 = vsel %vm994, %v1114, %v980
        %v1165 = vsel %vm994, %v1118, %v981
        %v1166 = vsel %vm994, %v1122, %v982
        %v1167 = vsel %vm994, %v1126, %v983
        %v1168 = vsel %vm994, %v1130, %v984
        %v1169 = vsel %vm994, %v1134, %v985
        %v1170 = vsel %vm994, %v1138, %v986
        %1171 = vset.pattern.permute.xlu0 1
        %1172 = vperm.xlu0 %1171, %v609
        %v1173 = vpop.permute.xlu0 %1172
        %1174 = vset.pattern.permute.xlu0 1
        %1175 = vperm.xlu0 %1174, %v610
        %v1176 = vpop.permute.xlu0 %1175
        %vm1177 = vcmp.eq.s32.totalorder %v1173, 1
        %vm1178 = vcmp.eq.s32.totalorder %v1176, 1
        %v1179 = vlaneseq
        %v1180 = vshrl.u32 %v1179, 7
        %v1181 = vsub.s32 1, %v1180
        %v1182 = vrot.slane %v207, %v1181
        %v1183 = vlaneseq
        %v1184 = vshrl.u32 %v1183, 7
        %v1185 = vsub.s32 5, %v1184
        %v1186 = vrot.slane %v207, %v1185
        %v1187 = vlaneseq
        %v1188 = vshrl.u32 %v1187, 7
        %v1189 = vsub.s32 1, %v1188
        %v1190 = vrot.slane %v208, %v1189
        %v1191 = vlaneseq
        %v1192 = vshrl.u32 %v1191, 7
        %v1193 = vsub.s32 5, %v1192
        %v1194 = vrot.slane %v208, %v1193
        %v1195 = vlaneseq
        %v1196 = vshrl.u32 %v1195, 7
        %v1197 = vsub.s32 1, %v1196
        %v1198 = vrot.slane %v209, %v1197
        %v1199 = vlaneseq
        %v1200 = vshrl.u32 %v1199, 7
        %v1201 = vsub.s32 5, %v1200
        %v1202 = vrot.slane %v209, %v1201
        %v1203 = vlaneseq
        %v1204 = vshrl.u32 %v1203, 7
        %v1205 = vsub.s32 1, %v1204
        %v1206 = vrot.slane %v210, %v1205
        %v1207 = vlaneseq
        %v1208 = vshrl.u32 %v1207, 7
        %v1209 = vsub.s32 5, %v1208
        %v1210 = vrot.slane %v210, %v1209
        %v1211 = vlaneseq
        %v1212 = vshrl.u32 %v1211, 7
        %v1213 = vsub.s32 1, %v1212
        %v1214 = vrot.slane %v211, %v1213
        %v1215 = vlaneseq
        %v1216 = vshrl.u32 %v1215, 7
        %v1217 = vsub.s32 5, %v1216
        %v1218 = vrot.slane %v211, %v1217
        %v1219 = vlaneseq
        %v1220 = vshrl.u32 %v1219, 7
        %v1221 = vsub.s32 1, %v1220
        %v1222 = vrot.slane %v212, %v1221
        %v1223 = vlaneseq
        %v1224 = vshrl.u32 %v1223, 7
        %v1225 = vsub.s32 5, %v1224
        %v1226 = vrot.slane %v212, %v1225
        %v1227 = vlaneseq
        %v1228 = vshrl.u32 %v1227, 7
        %v1229 = vsub.s32 1, %v1228
        %v1230 = vrot.slane %v213, %v1229
        %v1231 = vlaneseq
        %v1232 = vshrl.u32 %v1231, 7
        %v1233 = vsub.s32 5, %v1232
        %v1234 = vrot.slane %v213, %v1233
        %v1235 = vlaneseq
        %v1236 = vshrl.u32 %v1235, 7
        %v1237 = vsub.s32 1, %v1236
        %v1238 = vrot.slane %v214, %v1237
        %v1239 = vlaneseq
        %v1240 = vshrl.u32 %v1239, 7
        %v1241 = vsub.s32 5, %v1240
        %v1242 = vrot.slane %v214, %v1241
        %v1259 = vlaneseq
        %v1260 = vshrl.u32 %v1259, 7
        %v1261 = vsub.s32 1, %v1260
        %v1262 = vrot.slane %v1182, %v1261
        %v1263 = vlaneseq
        %v1264 = vshrl.u32 %v1263, 7
        %v1265 = vsub.s32 1, %v1264
        %v1266 = vrot.slane %v1186, %v1265
        %v1267 = vlaneseq
        %v1268 = vshrl.u32 %v1267, 7
        %v1269 = vsub.s32 1, %v1268
        %v1270 = vrot.slane %v1190, %v1269
        %v1271 = vlaneseq
        %v1272 = vshrl.u32 %v1271, 7
        %v1273 = vsub.s32 1, %v1272
        %v1274 = vrot.slane %v1194, %v1273
        %v1275 = vlaneseq
        %v1276 = vshrl.u32 %v1275, 7
        %v1277 = vsub.s32 1, %v1276
        %v1278 = vrot.slane %v1198, %v1277
        %v1279 = vlaneseq
        %v1280 = vshrl.u32 %v1279, 7
        %v1281 = vsub.s32 1, %v1280
        %v1282 = vrot.slane %v1202, %v1281
        %v1283 = vlaneseq
        %v1284 = vshrl.u32 %v1283, 7
        %v1285 = vsub.s32 1, %v1284
        %v1286 = vrot.slane %v1206, %v1285
        %v1287 = vlaneseq
        %v1288 = vshrl.u32 %v1287, 7
        %v1289 = vsub.s32 1, %v1288
        %v1290 = vrot.slane %v1210, %v1289
        %v1291 = vlaneseq
        %v1292 = vshrl.u32 %v1291, 7
        %v1293 = vsub.s32 1, %v1292
        %v1294 = vrot.slane %v1214, %v1293
        %v1295 = vlaneseq
        %v1296 = vshrl.u32 %v1295, 7
        %v1297 = vsub.s32 1, %v1296
        %v1298 = vrot.slane %v1218, %v1297
        %v1299 = vlaneseq
        %v1300 = vshrl.u32 %v1299, 7
        %v1301 = vsub.s32 1, %v1300
        %v1302 = vrot.slane %v1222, %v1301
        %v1303 = vlaneseq
        %v1304 = vshrl.u32 %v1303, 7
        %v1305 = vsub.s32 1, %v1304
        %v1306 = vrot.slane %v1226, %v1305
        %v1307 = vlaneseq
        %v1308 = vshrl.u32 %v1307, 7
        %v1309 = vsub.s32 1, %v1308
        %v1310 = vrot.slane %v1230, %v1309
        %v1311 = vlaneseq
        %v1312 = vshrl.u32 %v1311, 7
        %v1313 = vsub.s32 1, %v1312
        %v1314 = vrot.slane %v1234, %v1313
        %v1315 = vlaneseq
        %v1316 = vshrl.u32 %v1315, 7
        %v1317 = vsub.s32 1, %v1316
        %v1318 = vrot.slane %v1238, %v1317
        %v1319 = vlaneseq
        %v1320 = vshrl.u32 %v1319, 7
        %v1321 = vsub.s32 1, %v1320
        %v1322 = vrot.slane %v1242, %v1321
        %v1323 = vsel %vm1177, %v1262, %v1139
        %v1324 = vsel %vm1177, %v1266, %v1140
        %v1325 = vsel %vm1177, %v1270, %v1141
        %v1326 = vsel %vm1177, %v1274, %v1142
        %v1327 = vsel %vm1177, %v1278, %v1143
        %v1328 = vsel %vm1177, %v1282, %v1144
        %v1329 = vsel %vm1177, %v1286, %v1145
        %v1330 = vsel %vm1177, %v1290, %v1146
        %v1331 = vsel %vm1177, %v1294, %v1147
        %v1332 = vsel %vm1177, %v1298, %v1148
        %v1333 = vsel %vm1177, %v1302, %v1149
        %v1334 = vsel %vm1177, %v1306, %v1150
        %v1335 = vsel %vm1177, %v1310, %v1151
        %v1336 = vsel %vm1177, %v1314, %v1152
        %v1337 = vsel %vm1177, %v1318, %v1153
        %v1338 = vsel %vm1177, %v1322, %v1154
        %v1339 = vsel %vm1178, %v1262, %v1155
        %v1340 = vsel %vm1178, %v1266, %v1156
        %v1341 = vsel %vm1178, %v1270, %v1157
        %v1342 = vsel %vm1178, %v1274, %v1158
        %v1343 = vsel %vm1178, %v1278, %v1159
        %v1344 = vsel %vm1178, %v1282, %v1160
        %v1345 = vsel %vm1178, %v1286, %v1161
        %v1346 = vsel %vm1178, %v1290, %v1162
        %v1347 = vsel %vm1178, %v1294, %v1163
        %v1348 = vsel %vm1178, %v1298, %v1164
        %v1349 = vsel %vm1178, %v1302, %v1165
        %v1350 = vsel %vm1178, %v1306, %v1166
        %v1351 = vsel %vm1178, %v1310, %v1167
        %v1352 = vsel %vm1178, %v1314, %v1168
        %v1353 = vsel %vm1178, %v1318, %v1169
        %v1354 = vsel %vm1178, %v1322, %v1170
        %v1355 = vmul.f32 %v771, %v1323
        %v1356 = vmul.f32 %v772, %v1324
        %v1357 = vmul.f32 %v773, %v1325
        %v1358 = vmul.f32 %v774, %v1326
        %v1359 = vmul.f32 %v775, %v1327
        %v1360 = vmul.f32 %v776, %v1328
        %v1361 = vmul.f32 %v777, %v1329
        %v1362 = vmul.f32 %v778, %v1330
        %v1363 = vmul.f32 %v779, %v1331
        %v1364 = vmul.f32 %v780, %v1332
        %v1365 = vmul.f32 %v781, %v1333
        %v1366 = vmul.f32 %v782, %v1334
        %v1367 = vmul.f32 %v783, %v1335
        %v1368 = vmul.f32 %v784, %v1336
        %v1369 = vmul.f32 %v785, %v1337
        %v1370 = vmul.f32 %v786, %v1338
        %v1371 = vmul.f32 %v787, %v1339
        %v1372 = vmul.f32 %v788, %v1340
        %v1373 = vmul.f32 %v789, %v1341
        %v1374 = vmul.f32 %v790, %v1342
        %v1375 = vmul.f32 %v791, %v1343
        %v1376 = vmul.f32 %v792, %v1344
        %v1377 = vmul.f32 %v793, %v1345
        %v1378 = vmul.f32 %v794, %v1346
        %v1379 = vmul.f32 %v795, %v1347
        %v1380 = vmul.f32 %v796, %v1348
        %v1381 = vmul.f32 %v797, %v1349
        %v1382 = vmul.f32 %v798, %v1350
        %v1383 = vmul.f32 %v799, %v1351
        %v1384 = vmul.f32 %v800, %v1352
        %v1385 = vmul.f32 %v801, %v1353
        %v1386 = vmul.f32 %v802, %v1354
        %1387 = vset.pattern.permute.xlu0 2
        %1388 = vperm.xlu0 %1387, %v217
        %v1389 = vpop.permute.xlu0 %1388
        %1390 = vset.pattern.permute.xlu0 2
        %1391 = vperm.xlu0 %1390, %v218
        %v1392 = vpop.permute.xlu0 %1391
        %vm1393 = vcmp.eq.s32.totalorder %v1389, 1
        %vm1394 = vcmp.eq.s32.totalorder %v1392, 1
        %v1395 = vlaneseq
        %v1396 = vshrl.u32 %v1395, 7
        %v1397 = vsub.s32 2, %v1396
        %v1398 = vrot.slane %v189, %v1397
        %v1399 = vlaneseq
        %v1400 = vshrl.u32 %v1399, 7
        %v1401 = vsub.s32 6, %v1400
        %v1402 = vrot.slane %v189, %v1401
        %v1403 = vlaneseq
        %v1404 = vshrl.u32 %v1403, 7
        %v1405 = vsub.s32 2, %v1404
        %v1406 = vrot.slane %v190, %v1405
        %v1407 = vlaneseq
        %v1408 = vshrl.u32 %v1407, 7
        %v1409 = vsub.s32 6, %v1408
        %v1410 = vrot.slane %v190, %v1409
        %v1411 = vlaneseq
        %v1412 = vshrl.u32 %v1411, 7
        %v1413 = vsub.s32 2, %v1412
        %v1414 = vrot.slane %v191, %v1413
        %v1415 = vlaneseq
        %v1416 = vshrl.u32 %v1415, 7
        %v1417 = vsub.s32 6, %v1416
        %v1418 = vrot.slane %v191, %v1417
        %v1419 = vlaneseq
        %v1420 = vshrl.u32 %v1419, 7
        %v1421 = vsub.s32 2, %v1420
        %v1422 = vrot.slane %v192, %v1421
        %v1423 = vlaneseq
        %v1424 = vshrl.u32 %v1423, 7
        %v1425 = vsub.s32 6, %v1424
        %v1426 = vrot.slane %v192, %v1425
        %v1427 = vlaneseq
        %v1428 = vshrl.u32 %v1427, 7
        %v1429 = vsub.s32 2, %v1428
        %v1430 = vrot.slane %v193, %v1429
        %v1431 = vlaneseq
        %v1432 = vshrl.u32 %v1431, 7
        %v1433 = vsub.s32 6, %v1432
        %v1434 = vrot.slane %v193, %v1433
        %v1435 = vlaneseq
        %v1436 = vshrl.u32 %v1435, 7
        %v1437 = vsub.s32 2, %v1436
        %v1438 = vrot.slane %v194, %v1437
        %v1439 = vlaneseq
        %v1440 = vshrl.u32 %v1439, 7
        %v1441 = vsub.s32 6, %v1440
        %v1442 = vrot.slane %v194, %v1441
        %v1443 = vlaneseq
        %v1444 = vshrl.u32 %v1443, 7
        %v1445 = vsub.s32 2, %v1444
        %v1446 = vrot.slane %v195, %v1445
        %v1447 = vlaneseq
        %v1448 = vshrl.u32 %v1447, 7
        %v1449 = vsub.s32 6, %v1448
        %v1450 = vrot.slane %v195, %v1449
        %v1451 = vlaneseq
        %v1452 = vshrl.u32 %v1451, 7
        %v1453 = vsub.s32 2, %v1452
        %v1454 = vrot.slane %v196, %v1453
        %v1455 = vlaneseq
        %v1456 = vshrl.u32 %v1455, 7
        %v1457 = vsub.s32 6, %v1456
        %v1458 = vrot.slane %v196, %v1457
        %v1475 = vlaneseq
        %v1476 = vshrl.u32 %v1475, 7
        %v1477 = vsub.s32 2, %v1476
        %v1478 = vrot.slane %v1398, %v1477
        %v1479 = vlaneseq
        %v1480 = vshrl.u32 %v1479, 7
        %v1481 = vsub.s32 2, %v1480
        %v1482 = vrot.slane %v1402, %v1481
        %v1483 = vlaneseq
        %v1484 = vshrl.u32 %v1483, 7
        %v1485 = vsub.s32 2, %v1484
        %v1486 = vrot.slane %v1406, %v1485
        %v1487 = vlaneseq
        %v1488 = vshrl.u32 %v1487, 7
        %v1489 = vsub.s32 2, %v1488
        %v1490 = vrot.slane %v1410, %v1489
        %v1491 = vlaneseq
        %v1492 = vshrl.u32 %v1491, 7
        %v1493 = vsub.s32 2, %v1492
        %v1494 = vrot.slane %v1414, %v1493
        %v1495 = vlaneseq
        %v1496 = vshrl.u32 %v1495, 7
        %v1497 = vsub.s32 2, %v1496
        %v1498 = vrot.slane %v1418, %v1497
        %v1499 = vlaneseq
        %v1500 = vshrl.u32 %v1499, 7
        %v1501 = vsub.s32 2, %v1500
        %v1502 = vrot.slane %v1422, %v1501
        %v1503 = vlaneseq
        %v1504 = vshrl.u32 %v1503, 7
        %v1505 = vsub.s32 2, %v1504
        %v1506 = vrot.slane %v1426, %v1505
        %v1507 = vlaneseq
        %v1508 = vshrl.u32 %v1507, 7
        %v1509 = vsub.s32 2, %v1508
        %v1510 = vrot.slane %v1430, %v1509
        %v1511 = vlaneseq
        %v1512 = vshrl.u32 %v1511, 7
        %v1513 = vsub.s32 2, %v1512
        %v1514 = vrot.slane %v1434, %v1513
        %v1515 = vlaneseq
        %v1516 = vshrl.u32 %v1515, 7
        %v1517 = vsub.s32 2, %v1516
        %v1518 = vrot.slane %v1438, %v1517
        %v1519 = vlaneseq
        %v1520 = vshrl.u32 %v1519, 7
        %v1521 = vsub.s32 2, %v1520
        %v1522 = vrot.slane %v1442, %v1521
        %v1523 = vlaneseq
        %v1524 = vshrl.u32 %v1523, 7
        %v1525 = vsub.s32 2, %v1524
        %v1526 = vrot.slane %v1446, %v1525
        %v1527 = vlaneseq
        %v1528 = vshrl.u32 %v1527, 7
        %v1529 = vsub.s32 2, %v1528
        %v1530 = vrot.slane %v1450, %v1529
        %v1531 = vlaneseq
        %v1532 = vshrl.u32 %v1531, 7
        %v1533 = vsub.s32 2, %v1532
        %v1534 = vrot.slane %v1454, %v1533
        %v1535 = vlaneseq
        %v1536 = vshrl.u32 %v1535, 7
        %v1537 = vsub.s32 2, %v1536
        %v1538 = vrot.slane %v1458, %v1537
        %v1539 = vsel %vm1393, %v1478, 1.0
        %v1540 = vsel %vm1393, %v1482, 1.0
        %v1541 = vsel %vm1393, %v1486, 1.0
        %v1542 = vsel %vm1393, %v1490, 1.0
        %v1543 = vsel %vm1393, %v1494, 1.0
        %v1544 = vsel %vm1393, %v1498, 1.0
        %v1545 = vsel %vm1393, %v1502, 1.0
        %v1546 = vsel %vm1393, %v1506, 1.0
        %v1547 = vsel %vm1393, %v1510, 1.0
        %v1548 = vsel %vm1393, %v1514, 1.0
        %v1549 = vsel %vm1393, %v1518, 1.0
        %v1550 = vsel %vm1393, %v1522, 1.0
        %v1551 = vsel %vm1393, %v1526, 1.0
        %v1552 = vsel %vm1393, %v1530, 1.0
        %v1553 = vsel %vm1393, %v1534, 1.0
        %v1554 = vsel %vm1393, %v1538, 1.0
        %v1555 = vsel %vm1394, %v1478, 1.0
        %v1556 = vsel %vm1394, %v1482, 1.0
        %v1557 = vsel %vm1394, %v1486, 1.0
        %v1558 = vsel %vm1394, %v1490, 1.0
        %v1559 = vsel %vm1394, %v1494, 1.0
        %v1560 = vsel %vm1394, %v1498, 1.0
        %v1561 = vsel %vm1394, %v1502, 1.0
        %v1562 = vsel %vm1394, %v1506, 1.0
        %v1563 = vsel %vm1394, %v1510, 1.0
        %v1564 = vsel %vm1394, %v1514, 1.0
        %v1565 = vsel %vm1394, %v1518, 1.0
        %v1566 = vsel %vm1394, %v1522, 1.0
        %v1567 = vsel %vm1394, %v1526, 1.0
        %v1568 = vsel %vm1394, %v1530, 1.0
        %v1569 = vsel %vm1394, %v1534, 1.0
        %v1570 = vsel %vm1394, %v1538, 1.0
        %1571 = vset.pattern.permute.xlu0 2
        %1572 = vperm.xlu0 %1571, %v413
        %v1573 = vpop.permute.xlu0 %1572
        %1574 = vset.pattern.permute.xlu0 2
        %1575 = vperm.xlu0 %1574, %v414
        %v1576 = vpop.permute.xlu0 %1575
        %vm1577 = vcmp.eq.s32.totalorder %v1573, 1
        %vm1578 = vcmp.eq.s32.totalorder %v1576, 1
        %v1579 = vlaneseq
        %v1580 = vshrl.u32 %v1579, 7
        %v1581 = vsub.s32 2, %v1580
        %v1582 = vrot.slane %v199, %v1581
        %v1583 = vlaneseq
        %v1584 = vshrl.u32 %v1583, 7
        %v1585 = vsub.s32 6, %v1584
        %v1586 = vrot.slane %v199, %v1585
        %v1587 = vlaneseq
        %v1588 = vshrl.u32 %v1587, 7
        %v1589 = vsub.s32 2, %v1588
        %v1590 = vrot.slane %v200, %v1589
        %v1591 = vlaneseq
        %v1592 = vshrl.u32 %v1591, 7
        %v1593 = vsub.s32 6, %v1592
        %v1594 = vrot.slane %v200, %v1593
        %v1595 = vlaneseq
        %v1596 = vshrl.u32 %v1595, 7
        %v1597 = vsub.s32 2, %v1596
        %v1598 = vrot.slane %v201, %v1597
        %v1599 = vlaneseq
        %v1600 = vshrl.u32 %v1599, 7
        %v1601 = vsub.s32 6, %v1600
        %v1602 = vrot.slane %v201, %v1601
        %v1603 = vlaneseq
        %v1604 = vshrl.u32 %v1603, 7
        %v1605 = vsub.s32 2, %v1604
        %v1606 = vrot.slane %v202, %v1605
        %v1607 = vlaneseq
        %v1608 = vshrl.u32 %v1607, 7
        %v1609 = vsub.s32 6, %v1608
        %v1610 = vrot.slane %v202, %v1609
        %v1611 = vlaneseq
        %v1612 = vshrl.u32 %v1611, 7
        %v1613 = vsub.s32 2, %v1612
        %v1614 = vrot.slane %v203, %v1613
        %v1615 = vlaneseq
        %v1616 = vshrl.u32 %v1615, 7
        %v1617 = vsub.s32 6, %v1616
        %v1618 = vrot.slane %v203, %v1617
        %v1619 = vlaneseq
        %v1620 = vshrl.u32 %v1619, 7
        %v1621 = vsub.s32 2, %v1620
        %v1622 = vrot.slane %v204, %v1621
        %v1623 = vlaneseq
        %v1624 = vshrl.u32 %v1623, 7
        %v1625 = vsub.s32 6, %v1624
        %v1626 = vrot.slane %v204, %v1625
        %v1627 = vlaneseq
        %v1628 = vshrl.u32 %v1627, 7
        %v1629 = vsub.s32 2, %v1628
        %v1630 = vrot.slane %v205, %v1629
        %v1631 = vlaneseq
        %v1632 = vshrl.u32 %v1631, 7
        %v1633 = vsub.s32 6, %v1632
        %v1634 = vrot.slane %v205, %v1633
        %v1635 = vlaneseq
        %v1636 = vshrl.u32 %v1635, 7
        %v1637 = vsub.s32 2, %v1636
        %v1638 = vrot.slane %v206, %v1637
        %v1639 = vlaneseq
        %v1640 = vshrl.u32 %v1639, 7
        %v1641 = vsub.s32 6, %v1640
        %v1642 = vrot.slane %v206, %v1641
        %v1659 = vlaneseq
        %v1660 = vshrl.u32 %v1659, 7
        %v1661 = vsub.s32 2, %v1660
        %v1662 = vrot.slane %v1582, %v1661
        %v1663 = vlaneseq
        %v1664 = vshrl.u32 %v1663, 7
        %v1665 = vsub.s32 2, %v1664
        %v1666 = vrot.slane %v1586, %v1665
        %v1667 = vlaneseq
        %v1668 = vshrl.u32 %v1667, 7
        %v1669 = vsub.s32 2, %v1668
        %v1670 = vrot.slane %v1590, %v1669
        %v1671 = vlaneseq
        %v1672 = vshrl.u32 %v1671, 7
        %v1673 = vsub.s32 2, %v1672
        %v1674 = vrot.slane %v1594, %v1673
        %v1675 = vlaneseq
        %v1676 = vshrl.u32 %v1675, 7
        %v1677 = vsub.s32 2, %v1676
        %v1678 = vrot.slane %v1598, %v1677
        %v1679 = vlaneseq
        %v1680 = vshrl.u32 %v1679, 7
        %v1681 = vsub.s32 2, %v1680
        %v1682 = vrot.slane %v1602, %v1681
        %v1683 = vlaneseq
        %v1684 = vshrl.u32 %v1683, 7
        %v1685 = vsub.s32 2, %v1684
        %v1686 = vrot.slane %v1606, %v1685
        %v1687 = vlaneseq
        %v1688 = vshrl.u32 %v1687, 7
        %v1689 = vsub.s32 2, %v1688
        %v1690 = vrot.slane %v1610, %v1689
        %v1691 = vlaneseq
        %v1692 = vshrl.u32 %v1691, 7
        %v1693 = vsub.s32 2, %v1692
        %v1694 = vrot.slane %v1614, %v1693
        %v1695 = vlaneseq
        %v1696 = vshrl.u32 %v1695, 7
        %v1697 = vsub.s32 2, %v1696
        %v1698 = vrot.slane %v1618, %v1697
        %v1699 = vlaneseq
        %v1700 = vshrl.u32 %v1699, 7
        %v1701 = vsub.s32 2, %v1700
        %v1702 = vrot.slane %v1622, %v1701
        %v1703 = vlaneseq
        %v1704 = vshrl.u32 %v1703, 7
        %v1705 = vsub.s32 2, %v1704
        %v1706 = vrot.slane %v1626, %v1705
        %v1707 = vlaneseq
        %v1708 = vshrl.u32 %v1707, 7
        %v1709 = vsub.s32 2, %v1708
        %v1710 = vrot.slane %v1630, %v1709
        %v1711 = vlaneseq
        %v1712 = vshrl.u32 %v1711, 7
        %v1713 = vsub.s32 2, %v1712
        %v1714 = vrot.slane %v1634, %v1713
        %v1715 = vlaneseq
        %v1716 = vshrl.u32 %v1715, 7
        %v1717 = vsub.s32 2, %v1716
        %v1718 = vrot.slane %v1638, %v1717
        %v1719 = vlaneseq
        %v1720 = vshrl.u32 %v1719, 7
        %v1721 = vsub.s32 2, %v1720
        %v1722 = vrot.slane %v1642, %v1721
        %v1723 = vsel %vm1577, %v1662, %v1539
        %v1724 = vsel %vm1577, %v1666, %v1540
        %v1725 = vsel %vm1577, %v1670, %v1541
        %v1726 = vsel %vm1577, %v1674, %v1542
        %v1727 = vsel %vm1577, %v1678, %v1543
        %v1728 = vsel %vm1577, %v1682, %v1544
        %v1729 = vsel %vm1577, %v1686, %v1545
        %v1730 = vsel %vm1577, %v1690, %v1546
        %v1731 = vsel %vm1577, %v1694, %v1547
        %v1732 = vsel %vm1577, %v1698, %v1548
        %v1733 = vsel %vm1577, %v1702, %v1549
        %v1734 = vsel %vm1577, %v1706, %v1550
        %v1735 = vsel %vm1577, %v1710, %v1551
        %v1736 = vsel %vm1577, %v1714, %v1552
        %v1737 = vsel %vm1577, %v1718, %v1553
        %v1738 = vsel %vm1577, %v1722, %v1554
        %v1739 = vsel %vm1578, %v1662, %v1555
        %v1740 = vsel %vm1578, %v1666, %v1556
        %v1741 = vsel %vm1578, %v1670, %v1557
        %v1742 = vsel %vm1578, %v1674, %v1558
        %v1743 = vsel %vm1578, %v1678, %v1559
        %v1744 = vsel %vm1578, %v1682, %v1560
        %v1745 = vsel %vm1578, %v1686, %v1561
        %v1746 = vsel %vm1578, %v1690, %v1562
        %v1747 = vsel %vm1578, %v1694, %v1563
        %v1748 = vsel %vm1578, %v1698, %v1564
        %v1749 = vsel %vm1578, %v1702, %v1565
        %v1750 = vsel %vm1578, %v1706, %v1566
        %v1751 = vsel %vm1578, %v1710, %v1567
        %v1752 = vsel %vm1578, %v1714, %v1568
        %v1753 = vsel %vm1578, %v1718, %v1569
        %v1754 = vsel %vm1578, %v1722, %v1570
        %1755 = vset.pattern.permute.xlu0 2
        %1756 = vperm.xlu0 %1755, %v609
        %v1757 = vpop.permute.xlu0 %1756
        %1758 = vset.pattern.permute.xlu0 2
        %1759 = vperm.xlu0 %1758, %v610
        %v1760 = vpop.permute.xlu0 %1759
        %vm1761 = vcmp.eq.s32.totalorder %v1757, 1
        %vm1762 = vcmp.eq.s32.totalorder %v1760, 1
        %v1763 = vlaneseq
        %v1764 = vshrl.u32 %v1763, 7
        %v1765 = vsub.s32 2, %v1764
        %v1766 = vrot.slane %v207, %v1765
        %v1767 = vlaneseq
        %v1768 = vshrl.u32 %v1767, 7
        %v1769 = vsub.s32 6, %v1768
        %v1770 = vrot.slane %v207, %v1769
        %v1771 = vlaneseq
        %v1772 = vshrl.u32 %v1771, 7
        %v1773 = vsub.s32 2, %v1772
        %v1774 = vrot.slane %v208, %v1773
        %v1775 = vlaneseq
        %v1776 = vshrl.u32 %v1775, 7
        %v1777 = vsub.s32 6, %v1776
        %v1778 = vrot.slane %v208, %v1777
        %v1779 = vlaneseq
        %v1780 = vshrl.u32 %v1779, 7
        %v1781 = vsub.s32 2, %v1780
        %v1782 = vrot.slane %v209, %v1781
        %v1783 = vlaneseq
        %v1784 = vshrl.u32 %v1783, 7
        %v1785 = vsub.s32 6, %v1784
        %v1786 = vrot.slane %v209, %v1785
        %v1787 = vlaneseq
        %v1788 = vshrl.u32 %v1787, 7
        %v1789 = vsub.s32 2, %v1788
        %v1790 = vrot.slane %v210, %v1789
        %v1791 = vlaneseq
        %v1792 = vshrl.u32 %v1791, 7
        %v1793 = vsub.s32 6, %v1792
        %v1794 = vrot.slane %v210, %v1793
        %v1795 = vlaneseq
        %v1796 = vshrl.u32 %v1795, 7
        %v1797 = vsub.s32 2, %v1796
        %v1798 = vrot.slane %v211, %v1797
        %v1799 = vlaneseq
        %v1800 = vshrl.u32 %v1799, 7
        %v1801 = vsub.s32 6, %v1800
        %v1802 = vrot.slane %v211, %v1801
        %v1803 = vlaneseq
        %v1804 = vshrl.u32 %v1803, 7
        %v1805 = vsub.s32 2, %v1804
        %v1806 = vrot.slane %v212, %v1805
        %v1807 = vlaneseq
        %v1808 = vshrl.u32 %v1807, 7
        %v1809 = vsub.s32 6, %v1808
        %v1810 = vrot.slane %v212, %v1809
        %v1811 = vlaneseq
        %v1812 = vshrl.u32 %v1811, 7
        %v1813 = vsub.s32 2, %v1812
        %v1814 = vrot.slane %v213, %v1813
        %v1815 = vlaneseq
        %v1816 = vshrl.u32 %v1815, 7
        %v1817 = vsub.s32 6, %v1816
        %v1818 = vrot.slane %v213, %v1817
        %v1819 = vlaneseq
        %v1820 = vshrl.u32 %v1819, 7
        %v1821 = vsub.s32 2, %v1820
        %v1822 = vrot.slane %v214, %v1821
        %v1823 = vlaneseq
        %v1824 = vshrl.u32 %v1823, 7
        %v1825 = vsub.s32 6, %v1824
        %v1826 = vrot.slane %v214, %v1825
        %v1843 = vlaneseq
        %v1844 = vshrl.u32 %v1843, 7
        %v1845 = vsub.s32 2, %v1844
        %v1846 = vrot.slane %v1766, %v1845
        %v1847 = vlaneseq
        %v1848 = vshrl.u32 %v1847, 7
        %v1849 = vsub.s32 2, %v1848
        %v1850 = vrot.slane %v1770, %v1849
        %v1851 = vlaneseq
        %v1852 = vshrl.u32 %v1851, 7
        %v1853 = vsub.s32 2, %v1852
        %v1854 = vrot.slane %v1774, %v1853
        %v1855 = vlaneseq
        %v1856 = vshrl.u32 %v1855, 7
        %v1857 = vsub.s32 2, %v1856
        %v1858 = vrot.slane %v1778, %v1857
        %v1859 = vlaneseq
        %v1860 = vshrl.u32 %v1859, 7
        %v1861 = vsub.s32 2, %v1860
        %v1862 = vrot.slane %v1782, %v1861
        %v1863 = vlaneseq
        %v1864 = vshrl.u32 %v1863, 7
        %v1865 = vsub.s32 2, %v1864
        %v1866 = vrot.slane %v1786, %v1865
        %v1867 = vlaneseq
        %v1868 = vshrl.u32 %v1867, 7
        %v1869 = vsub.s32 2, %v1868
        %v1870 = vrot.slane %v1790, %v1869
        %v1871 = vlaneseq
        %v1872 = vshrl.u32 %v1871, 7
        %v1873 = vsub.s32 2, %v1872
        %v1874 = vrot.slane %v1794, %v1873
        %v1875 = vlaneseq
        %v1876 = vshrl.u32 %v1875, 7
        %v1877 = vsub.s32 2, %v1876
        %v1878 = vrot.slane %v1798, %v1877
        %v1879 = vlaneseq
        %v1880 = vshrl.u32 %v1879, 7
        %v1881 = vsub.s32 2, %v1880
        %v1882 = vrot.slane %v1802, %v1881
        %v1883 = vlaneseq
        %v1884 = vshrl.u32 %v1883, 7
        %v1885 = vsub.s32 2, %v1884
        %v1886 = vrot.slane %v1806, %v1885
        %v1887 = vlaneseq
        %v1888 = vshrl.u32 %v1887, 7
        %v1889 = vsub.s32 2, %v1888
        %v1890 = vrot.slane %v1810, %v1889
        %v1891 = vlaneseq
        %v1892 = vshrl.u32 %v1891, 7
        %v1893 = vsub.s32 2, %v1892
        %v1894 = vrot.slane %v1814, %v1893
        %v1895 = vlaneseq
        %v1896 = vshrl.u32 %v1895, 7
        %v1897 = vsub.s32 2, %v1896
        %v1898 = vrot.slane %v1818, %v1897
        %v1899 = vlaneseq
        %v1900 = vshrl.u32 %v1899, 7
        %v1901 = vsub.s32 2, %v1900
        %v1902 = vrot.slane %v1822, %v1901
        %v1903 = vlaneseq
        %v1904 = vshrl.u32 %v1903, 7
        %v1905 = vsub.s32 2, %v1904
        %v1906 = vrot.slane %v1826, %v1905
        %v1907 = vsel %vm1761, %v1846, %v1723
        %v1908 = vsel %vm1761, %v1850, %v1724
        %v1909 = vsel %vm1761, %v1854, %v1725
        %v1910 = vsel %vm1761, %v1858, %v1726
        %v1911 = vsel %vm1761, %v1862, %v1727
        %v1912 = vsel %vm1761, %v1866, %v1728
        %v1913 = vsel %vm1761, %v1870, %v1729
        %v1914 = vsel %vm1761, %v1874, %v1730
        %v1915 = vsel %vm1761, %v1878, %v1731
        %v1916 = vsel %vm1761, %v1882, %v1732
        %v1917 = vsel %vm1761, %v1886, %v1733
        %v1918 = vsel %vm1761, %v1890, %v1734
        %v1919 = vsel %vm1761, %v1894, %v1735
        %v1920 = vsel %vm1761, %v1898, %v1736
        %v1921 = vsel %vm1761, %v1902, %v1737
        %v1922 = vsel %vm1761, %v1906, %v1738
        %v1923 = vsel %vm1762, %v1846, %v1739
        %v1924 = vsel %vm1762, %v1850, %v1740
        %v1925 = vsel %vm1762, %v1854, %v1741
        %v1926 = vsel %vm1762, %v1858, %v1742
        %v1927 = vsel %vm1762, %v1862, %v1743
        %v1928 = vsel %vm1762, %v1866, %v1744
        %v1929 = vsel %vm1762, %v1870, %v1745
        %v1930 = vsel %vm1762, %v1874, %v1746
        %v1931 = vsel %vm1762, %v1878, %v1747
        %v1932 = vsel %vm1762, %v1882, %v1748
        %v1933 = vsel %vm1762, %v1886, %v1749
        %v1934 = vsel %vm1762, %v1890, %v1750
        %v1935 = vsel %vm1762, %v1894, %v1751
        %v1936 = vsel %vm1762, %v1898, %v1752
        %v1937 = vsel %vm1762, %v1902, %v1753
        %v1938 = vsel %vm1762, %v1906, %v1754
        %v1939 = vmul.f32 %v1355, %v1907
        %v1940 = vmul.f32 %v1356, %v1908
        %v1941 = vmul.f32 %v1357, %v1909
        %v1942 = vmul.f32 %v1358, %v1910
        %v1943 = vmul.f32 %v1359, %v1911
        %v1944 = vmul.f32 %v1360, %v1912
        %v1945 = vmul.f32 %v1361, %v1913
        %v1946 = vmul.f32 %v1362, %v1914
        %v1947 = vmul.f32 %v1363, %v1915
        %v1948 = vmul.f32 %v1364, %v1916
        %v1949 = vmul.f32 %v1365, %v1917
        %v1950 = vmul.f32 %v1366, %v1918
        %v1951 = vmul.f32 %v1367, %v1919
        %v1952 = vmul.f32 %v1368, %v1920
        %v1953 = vmul.f32 %v1369, %v1921
        %v1954 = vmul.f32 %v1370, %v1922
        %v1955 = vmul.f32 %v1371, %v1923
        %v1956 = vmul.f32 %v1372, %v1924
        %v1957 = vmul.f32 %v1373, %v1925
        %v1958 = vmul.f32 %v1374, %v1926
        %v1959 = vmul.f32 %v1375, %v1927
        %v1960 = vmul.f32 %v1376, %v1928
        %v1961 = vmul.f32 %v1377, %v1929
        %v1962 = vmul.f32 %v1378, %v1930
        %v1963 = vmul.f32 %v1379, %v1931
        %v1964 = vmul.f32 %v1380, %v1932
        %v1965 = vmul.f32 %v1381, %v1933
        %v1966 = vmul.f32 %v1382, %v1934
        %v1967 = vmul.f32 %v1383, %v1935
        %v1968 = vmul.f32 %v1384, %v1936
        %v1969 = vmul.f32 %v1385, %v1937
        %v1970 = vmul.f32 %v1386, %v1938
        %v1971 = vld [vmem:[%s1] sm:$0xff]
        %v1972 = vld [vmem:[%s1 + $0x8] sm:$0xff]
        %v1973 = vld [vmem:[%s1 + $0x10] sm:$0xff]
        %v1974 = vld [vmem:[%s1 + $0x18] sm:$0xff]
        %vm1975 = vcmask 130048
        %v1977 = vsel %vm1975, %v1971, 0
        %v1980 = vsel %vm1975, %v1972, 0
        %v1983 = vsel %vm1975, %v1973, 0
        %v1986 = vsel %vm1975, %v1974, 0
        %1988 = vmatprep.subr.mxu0 %v1940
        %1989 = vmatpush1.msra.mxu0 %v1939
        %1990 = vmatprep.subr.mxu0 %v1956
        %1991 = vmatpush1.msra.mxu0 %v1955
        %1992 = vmatprep.subr.mxu0 0.0
        %1993 = vmatpush1.msra.mxu0 0.0
        %1994 = vmatprep.subr.mxu0 0.0
        %1995 = vmatpush1.msra.mxu0 0.0
        %1996 = vmatprep.subr.mxu0 0.0
        %1997 = vmatpush1.msra.mxu0 0.0
        %1998 = vmatprep.subr.mxu0 0.0
        %1999 = vmatpush1.msra.mxu0 0.0
        %2000 = vmatprep.subr.mxu0 0.0
        %2001 = vmatpush1.msra.mxu0 0.0
        %2002 = vmatprep.subr.mxu0 0.0
        %2003 = vmatpush1.msra.mxu0 0.0
        %2004 = vmatprep.subr.mxu0 0.0
        %2005 = vmatpush1.msra.mxu0 0.0
        %2006 = vmatprep.subr.mxu0 0.0
        %2007 = vmatpush1.msra.mxu0 0.0
        %2008 = vmatprep.subr.mxu0 0.0
        %2009 = vmatpush1.msra.mxu0 0.0
        %2010 = vmatprep.subr.mxu0 0.0
        %2011 = vmatpush1.msra.mxu0 0.0
        %2012 = vmatprep.subr.mxu0 0.0
        %2013 = vmatpush1.msra.mxu0 0.0
        %2014 = vmatprep.subr.mxu0 0.0
        %2015 = vmatpush1.msra.mxu0 0.0
        %2016 = vmatprep.subr.mxu0 0.0
        %2017 = vmatpush1.msra.mxu0 0.0
        %2018 = vmatprep.subr.mxu0 0.0
        %2019 = vmatpush1.msra.mxu0 0.0
        %2020 = vmatprep.subr.mxu0 0.0
        %2021 = vmatpush1.msra.mxu0 0.0
        %2022 = vmatprep.subr.mxu0 0.0
        %2023 = vmatpush1.msra.mxu0 0.0
        %2024 = vmatprep.subr.mxu0 0.0
        %2025 = vmatpush1.msra.mxu0 0.0
        %2026 = vmatprep.subr.mxu0 0.0
        %2027 = vmatpush1.msra.mxu0 0.0
        %2028 = vmatprep.subr.mxu0 0.0
        %2029 = vmatpush1.msra.mxu0 0.0
        %2030 = vmatprep.subr.mxu0 0.0
        %2031 = vmatpush1.msra.mxu0 0.0
        %2032 = vmatprep.subr.mxu0 0.0
        %2033 = vmatpush1.msra.mxu0 0.0
        %2034 = vmatprep.subr.mxu0 0.0
        %2035 = vmatpush1.msra.mxu0 0.0
        %2036 = vmatprep.subr.mxu0 0.0
        %2037 = vmatpush1.msra.mxu0 0.0
        %2038 = vmatprep.subr.mxu0 0.0
        %2039 = vmatpush1.msra.mxu0 0.0
        %2040 = vmatprep.subr.mxu0 0.0
        %2041 = vmatpush1.msra.mxu0 0.0
        %2042 = vmatprep.subr.mxu0 0.0
        %2043 = vmatpush1.msra.mxu0 0.0
        %2044 = vmatprep.subr.mxu0 0.0
        %2045 = vmatpush1.msra.mxu0 0.0
        %2046 = vmatprep.subr.mxu0 0.0
        %2047 = vmatpush1.msra.mxu0 0.0
        %2048 = vmatprep.subr.mxu0 0.0
        %2049 = vmatpush1.msra.mxu0 0.0
        %2050 = vmatprep.subr.mxu0 0.0
        %2051 = vmatpush1.msra.mxu0 0.0
        %2052 = vmatprep.mubr.f32.mxu0 0.0
        %2053 = vmatmul.mubr.f32.gmra.mrb[0].mxu0 %v1977
        %v2054 = vpop.f32.mrb[0].mxu0
        %v2055 = vadd.f32 0.0, %v2054
        %v2056 = vpop.f32.mrb[0].mxu0
        %v2057 = vadd.f32 0.0, %v2056
        %2058 = vmatprep.mubr.f32.mxu0 0.0
        %2059 = vmatmul.mubr.f32.gmra.mrb[0].mxu0 %v1980
        %v2060 = vpop.f32.mrb[0].mxu0
        %v2061 = vadd.f32 0.0, %v2060
        %v2062 = vpop.f32.mrb[0].mxu0
        %v2063 = vadd.f32 0.0, %v2062
        %2064 = vmatprep.mubr.f32.mxu0 0.0
        %2065 = vmatmul.mubr.f32.gmra.mrb[0].mxu0 %v1983
        %v2066 = vpop.f32.mrb[0].mxu0
        %v2067 = vadd.f32 0.0, %v2066
        %v2068 = vpop.f32.mrb[0].mxu0
        %v2069 = vadd.f32 0.0, %v2068
        %2070 = vmatprep.mubr.f32.mxu0 0.0
        %2071 = vmatmul.mubr.f32.gmra.mrb[0].mxu0 %v1986
        %v2072 = vpop.f32.mrb[0].mxu0
        %v2073 = vadd.f32 0.0, %v2072
        %v2074 = vpop.f32.mrb[0].mxu0
        %v2075 = vadd.f32 0.0, %v2074
        %2076 = vdwg.mxu0
        %2077 = vmatprep.subr.mxu0 %v1942
        %2078 = vmatpush1.msra.mxu0 %v1941
        %2079 = vmatprep.subr.mxu0 %v1958
        %2080 = vmatpush1.msra.mxu0 %v1957
        %2081 = vmatprep.subr.mxu0 0.0
        %2082 = vmatpush1.msra.mxu0 0.0
        %2083 = vmatprep.subr.mxu0 0.0
        %2084 = vmatpush1.msra.mxu0 0.0
        %2085 = vmatprep.subr.mxu0 0.0
        %2086 = vmatpush1.msra.mxu0 0.0
        %2087 = vmatprep.subr.mxu0 0.0
        %2088 = vmatpush1.msra.mxu0 0.0
        %2089 = vmatprep.subr.mxu0 0.0
        %2090 = vmatpush1.msra.mxu0 0.0
        %2091 = vmatprep.subr.mxu0 0.0
        %2092 = vmatpush1.msra.mxu0 0.0
        %2093 = vmatprep.subr.mxu0 0.0
        %2094 = vmatpush1.msra.mxu0 0.0
        %2095 = vmatprep.subr.mxu0 0.0
        %2096 = vmatpush1.msra.mxu0 0.0
        %2097 = vmatprep.subr.mxu0 0.0
        %2098 = vmatpush1.msra.mxu0 0.0
        %2099 = vmatprep.subr.mxu0 0.0
        %2100 = vmatpush1.msra.mxu0 0.0
        %2101 = vmatprep.subr.mxu0 0.0
        %2102 = vmatpush1.msra.mxu0 0.0
        %2103 = vmatprep.subr.mxu0 0.0
        %2104 = vmatpush1.msra.mxu0 0.0
        %2105 = vmatprep.subr.mxu0 0.0
        %2106 = vmatpush1.msra.mxu0 0.0
        %2107 = vmatprep.subr.mxu0 0.0
        %2108 = vmatpush1.msra.mxu0 0.0
        %2109 = vmatprep.subr.mxu0 0.0
        %2110 = vmatpush1.msra.mxu0 0.0
        %2111 = vmatprep.subr.mxu0 0.0
        %2112 = vmatpush1.msra.mxu0 0.0
        %2113 = vmatprep.subr.mxu0 0.0
        %2114 = vmatpush1.msra.mxu0 0.0
        %2115 = vmatprep.subr.mxu0 0.0
        %2116 = vmatpush1.msra.mxu0 0.0
        %2117 = vmatprep.subr.mxu0 0.0
        %2118 = vmatpush1.msra.mxu0 0.0
        %2119 = vmatprep.subr.mxu0 0.0
        %2120 = vmatpush1.msra.mxu0 0.0
        %2121 = vmatprep.subr.mxu0 0.0
        %2122 = vmatpush1.msra.mxu0 0.0
        %2123 = vmatprep.subr.mxu0 0.0
        %2124 = vmatpush1.msra.mxu0 0.0
        %2125 = vmatprep.subr.mxu0 0.0
        %2126 = vmatpush1.msra.mxu0 0.0
        %2127 = vmatprep.subr.mxu0 0.0
        %2128 = vmatpush1.msra.mxu0 0.0
        %2129 = vmatprep.subr.mxu0 0.0
        %2130 = vmatpush1.msra.mxu0 0.0
        %2131 = vmatprep.subr.mxu0 0.0
        %2132 = vmatpush1.msra.mxu0 0.0
        %2133 = vmatprep.subr.mxu0 0.0
        %2134 = vmatpush1.msra.mxu0 0.0
        %2135 = vmatprep.subr.mxu0 0.0
        %2136 = vmatpush1.msra.mxu0 0.0
        %2137 = vmatprep.subr.mxu0 0.0
        %2138 = vmatpush1.msra.mxu0 0.0
        %2139 = vmatprep.subr.mxu0 0.0
        %2140 = vmatpush1.msra.mxu0 0.0
        %2141 = vmatprep.mubr.f32.mxu0 0.0
        %2142 = vmatmul.mubr.f32.gmra.mrb[0].mxu0 %v1977
        %v2143 = vpop.f32.mrb[0].mxu0
        %v2144 = vadd.f32 0.0, %v2143
        %v2145 = vpop.f32.mrb[0].mxu0
        %v2146 = vadd.f32 0.0, %v2145
        %2147 = vmatprep.mubr.f32.mxu0 0.0
        %2148 = vmatmul.mubr.f32.gmra.mrb[0].mxu0 %v1980
        %v2149 = vpop.f32.mrb[0].mxu0
        %v2150 = vadd.f32 0.0, %v2149
        %v2151 = vpop.f32.mrb[0].mxu0
        %v2152 = vadd.f32 0.0, %v2151
        %2153 = vmatprep.mubr.f32.mxu0 0.0
        %2154 = vmatmul.mubr.f32.gmra.mrb[0].mxu0 %v1983
        %v2155 = vpop.f32.mrb[0].mxu0
        %v2156 = vadd.f32 0.0, %v2155
        %v2157 = vpop.f32.mrb[0].mxu0
        %v2158 = vadd.f32 0.0, %v2157
        %2159 = vmatprep.mubr.f32.mxu0 0.0
        %2160 = vmatmul.mubr.f32.gmra.mrb[0].mxu0 %v1986
        %v2161 = vpop.f32.mrb[0].mxu0
        %v2162 = vadd.f32 0.0, %v2161
        %v2163 = vpop.f32.mrb[0].mxu0
        %v2164 = vadd.f32 0.0, %v2163
        %2165 = vdwg.mxu0
        %2166 = vmatprep.subr.mxu0 %v1944
        %2167 = vmatpush1.msra.mxu0 %v1943
        %2168 = vmatprep.subr.mxu0 %v1960
        %2169 = vmatpush1.msra.mxu0 %v1959
        %2170 = vmatprep.subr.mxu0 0.0
        %2171 = vmatpush1.msra.mxu0 0.0
        %2172 = vmatprep.subr.mxu0 0.0
        %2173 = vmatpush1.msra.mxu0 0.0
        %2174 = vmatprep.subr.mxu0 0.0
        %2175 = vmatpush1.msra.mxu0 0.0
        %2176 = vmatprep.subr.mxu0 0.0
        %2177 = vmatpush1.msra.mxu0 0.0
        %2178 = vmatprep.subr.mxu0 0.0
        %2179 = vmatpush1.msra.mxu0 0.0
        %2180 = vmatprep.subr.mxu0 0.0
        %2181 = vmatpush1.msra.mxu0 0.0
        %2182 = vmatprep.subr.mxu0 0.0
        %2183 = vmatpush1.msra.mxu0 0.0
        %2184 = vmatprep.subr.mxu0 0.0
        %2185 = vmatpush1.msra.mxu0 0.0
        %2186 = vmatprep.subr.mxu0 0.0
        %2187 = vmatpush1.msra.mxu0 0.0
        %2188 = vmatprep.subr.mxu0 0.0
        %2189 = vmatpush1.msra.mxu0 0.0
        %2190 = vmatprep.subr.mxu0 0.0
        %2191 = vmatpush1.msra.mxu0 0.0
        %2192 = vmatprep.subr.mxu0 0.0
        %2193 = vmatpush1.msra.mxu0 0.0
        %2194 = vmatprep.subr.mxu0 0.0
        %2195 = vmatpush1.msra.mxu0 0.0
        %2196 = vmatprep.subr.mxu0 0.0
        %2197 = vmatpush1.msra.mxu0 0.0
        %2198 = vmatprep.subr.mxu0 0.0
        %2199 = vmatpush1.msra.mxu0 0.0
        %2200 = vmatprep.subr.mxu0 0.0
        %2201 = vmatpush1.msra.mxu0 0.0
        %2202 = vmatprep.subr.mxu0 0.0
        %2203 = vmatpush1.msra.mxu0 0.0
        %2204 = vmatprep.subr.mxu0 0.0
        %2205 = vmatpush1.msra.mxu0 0.0
        %2206 = vmatprep.subr.mxu0 0.0
        %2207 = vmatpush1.msra.mxu0 0.0
        %2208 = vmatprep.subr.mxu0 0.0
        %2209 = vmatpush1.msra.mxu0 0.0
        %2210 = vmatprep.subr.mxu0 0.0
        %2211 = vmatpush1.msra.mxu0 0.0
        %2212 = vmatprep.subr.mxu0 0.0
        %2213 = vmatpush1.msra.mxu0 0.0
        %2214 = vmatprep.subr.mxu0 0.0
        %2215 = vmatpush1.msra.mxu0 0.0
        %2216 = vmatprep.subr.mxu0 0.0
        %2217 = vmatpush1.msra.mxu0 0.0
        %2218 = vmatprep.subr.mxu0 0.0
        %2219 = vmatpush1.msra.mxu0 0.0
        %2220 = vmatprep.subr.mxu0 0.0
        %2221 = vmatpush1.msra.mxu0 0.0
        %2222 = vmatprep.subr.mxu0 0.0
        %2223 = vmatpush1.msra.mxu0 0.0
        %2224 = vmatprep.subr.mxu0 0.0
        %2225 = vmatpush1.msra.mxu0 0.0
        %2226 = vmatprep.subr.mxu0 0.0
        %2227 = vmatpush1.msra.mxu0 0.0
        %2228 = vmatprep.subr.mxu0 0.0
        %2229 = vmatpush1.msra.mxu0 0.0
        %2230 = vmatprep.mubr.f32.mxu0 0.0
        %2231 = vmatmul.mubr.f32.gmra.mrb[0].mxu0 %v1977
        %v2232 = vpop.f32.mrb[0].mxu0
        %v2233 = vadd.f32 0.0, %v2232
        %v2234 = vpop.f32.mrb[0].mxu0
        %v2235 = vadd.f32 0.0, %v2234
        %2236 = vmatprep.mubr.f32.mxu0 0.0
        %2237 = vmatmul.mubr.f32.gmra.mrb[0].mxu0 %v1980
        %v2238 = vpop.f32.mrb[0].mxu0
        %v2239 = vadd.f32 0.0, %v2238
        %v2240 = vpop.f32.mrb[0].mxu0
        %v2241 = vadd.f32 0.0, %v2240
        %2242 = vmatprep.mubr.f32.mxu0 0.0
        %2243 = vmatmul.mubr.f32.gmra.mrb[0].mxu0 %v1983
        %v2244 = vpop.f32.mrb[0].mxu0
        %v2245 = vadd.f32 0.0, %v2244
        %v2246 = vpop.f32.mrb[0].mxu0
        %v2247 = vadd.f32 0.0, %v2246
        %2248 = vmatprep.mubr.f32.mxu0 0.0
        %2249 = vmatmul.mubr.f32.gmra.mrb[0].mxu0 %v1986
        %v2250 = vpop.f32.mrb[0].mxu0
        %v2251 = vadd.f32 0.0, %v2250
        %v2252 = vpop.f32.mrb[0].mxu0
        %v2253 = vadd.f32 0.0, %v2252
        %2254 = vdwg.mxu0
        %2255 = vmatprep.subr.mxu0 %v1946
        %2256 = vmatpush1.msra.mxu0 %v1945
        %2257 = vmatprep.subr.mxu0 %v1962
        %2258 = vmatpush1.msra.mxu0 %v1961
        %2259 = vmatprep.subr.mxu0 0.0
        %2260 = vmatpush1.msra.mxu0 0.0
        %2261 = vmatprep.subr.mxu0 0.0
        %2262 = vmatpush1.msra.mxu0 0.0
        %2263 = vmatprep.subr.mxu0 0.0
        %2264 = vmatpush1.msra.mxu0 0.0
        %2265 = vmatprep.subr.mxu0 0.0
        %2266 = vmatpush1.msra.mxu0 0.0
        %2267 = vmatprep.subr.mxu0 0.0
        %2268 = vmatpush1.msra.mxu0 0.0
        %2269 = vmatprep.subr.mxu0 0.0
        %2270 = vmatpush1.msra.mxu0 0.0
        %2271 = vmatprep.subr.mxu0 0.0
        %2272 = vmatpush1.msra.mxu0 0.0
        %2273 = vmatprep.subr.mxu0 0.0
        %2274 = vmatpush1.msra.mxu0 0.0
        %2275 = vmatprep.subr.mxu0 0.0
        %2276 = vmatpush1.msra.mxu0 0.0
        %2277 = vmatprep.subr.mxu0 0.0
        %2278 = vmatpush1.msra.mxu0 0.0
        %2279 = vmatprep.subr.mxu0 0.0
        %2280 = vmatpush1.msra.mxu0 0.0
        %2281 = vmatprep.subr.mxu0 0.0
        %2282 = vmatpush1.msra.mxu0 0.0
        %2283 = vmatprep.subr.mxu0 0.0
        %2284 = vmatpush1.msra.mxu0 0.0
        %2285 = vmatprep.subr.mxu0 0.0
        %2286 = vmatpush1.msra.mxu0 0.0
        %2287 = vmatprep.subr.mxu0 0.0
        %2288 = vmatpush1.msra.mxu0 0.0
        %2289 = vmatprep.subr.mxu0 0.0
        %2290 = vmatpush1.msra.mxu0 0.0
        %2291 = vmatprep.subr.mxu0 0.0
        %2292 = vmatpush1.msra.mxu0 0.0
        %2293 = vmatprep.subr.mxu0 0.0
        %2294 = vmatpush1.msra.mxu0 0.0
        %2295 = vmatprep.subr.mxu0 0.0
        %2296 = vmatpush1.msra.mxu0 0.0
        %2297 = vmatprep.subr.mxu0 0.0
        %2298 = vmatpush1.msra.mxu0 0.0
        %2299 = vmatprep.subr.mxu0 0.0
        %2300 = vmatpush1.msra.mxu0 0.0
        %2301 = vmatprep.subr.mxu0 0.0
        %2302 = vmatpush1.msra.mxu0 0.0
        %2303 = vmatprep.subr.mxu0 0.0
        %2304 = vmatpush1.msra.mxu0 0.0
        %2305 = vmatprep.subr.mxu0 0.0
        %2306 = vmatpush1.msra.mxu0 0.0
        %2307 = vmatprep.subr.mxu0 0.0
        %2308 = vmatpush1.msra.mxu0 0.0
        %2309 = vmatprep.subr.mxu0 0.0
        %2310 = vmatpush1.msra.mxu0 0.0
        %2311 = vmatprep.subr.mxu0 0.0
        %2312 = vmatpush1.msra.mxu0 0.0
        %2313 = vmatprep.subr.mxu0 0.0
        %2314 = vmatpush1.msra.mxu0 0.0
        %2315 = vmatprep.subr.mxu0 0.0
        %2316 = vmatpush1.msra.mxu0 0.0
        %2317 = vmatprep.subr.mxu0 0.0
        %2318 = vmatpush1.msra.mxu0 0.0
        %2319 = vmatprep.mubr.f32.mxu0 0.0
        %2320 = vmatmul.mubr.f32.gmra.mrb[0].mxu0 %v1977
        %v2321 = vpop.f32.mrb[0].mxu0
        %v2322 = vadd.f32 0.0, %v2321
        %v2323 = vpop.f32.mrb[0].mxu0
        %v2324 = vadd.f32 0.0, %v2323
        %2325 = vmatprep.mubr.f32.mxu0 0.0
        %2326 = vmatmul.mubr.f32.gmra.mrb[0].mxu0 %v1980
        %v2327 = vpop.f32.mrb[0].mxu0
        %v2328 = vadd.f32 0.0, %v2327
        %v2329 = vpop.f32.mrb[0].mxu0
        %v2330 = vadd.f32 0.0, %v2329
        %2331 = vmatprep.mubr.f32.mxu0 0.0
        %2332 = vmatmul.mubr.f32.gmra.mrb[0].mxu0 %v1983
        %v2333 = vpop.f32.mrb[0].mxu0
        %v2334 = vadd.f32 0.0, %v2333
        %v2335 = vpop.f32.mrb[0].mxu0
        %v2336 = vadd.f32 0.0, %v2335
        %2337 = vmatprep.mubr.f32.mxu0 0.0
        %2338 = vmatmul.mubr.f32.gmra.mrb[0].mxu0 %v1986
        %v2339 = vpop.f32.mrb[0].mxu0
        %v2340 = vadd.f32 0.0, %v2339
        %v2341 = vpop.f32.mrb[0].mxu0
        %v2342 = vadd.f32 0.0, %v2341
        %2343 = vdwg.mxu0
        %2344 = vmatprep.subr.mxu0 %v1948
        %2345 = vmatpush1.msra.mxu0 %v1947
        %2346 = vmatprep.subr.mxu0 %v1964
        %2347 = vmatpush1.msra.mxu0 %v1963
        %2348 = vmatprep.subr.mxu0 0.0
        %2349 = vmatpush1.msra.mxu0 0.0
        %2350 = vmatprep.subr.mxu0 0.0
        %2351 = vmatpush1.msra.mxu0 0.0
        %2352 = vmatprep.subr.mxu0 0.0
        %2353 = vmatpush1.msra.mxu0 0.0
        %2354 = vmatprep.subr.mxu0 0.0
        %2355 = vmatpush1.msra.mxu0 0.0
        %2356 = vmatprep.subr.mxu0 0.0
        %2357 = vmatpush1.msra.mxu0 0.0
        %2358 = vmatprep.subr.mxu0 0.0
        %2359 = vmatpush1.msra.mxu0 0.0
        %2360 = vmatprep.subr.mxu0 0.0
        %2361 = vmatpush1.msra.mxu0 0.0
        %2362 = vmatprep.subr.mxu0 0.0
        %2363 = vmatpush1.msra.mxu0 0.0
        %2364 = vmatprep.subr.mxu0 0.0
        %2365 = vmatpush1.msra.mxu0 0.0
        %2366 = vmatprep.subr.mxu0 0.0
        %2367 = vmatpush1.msra.mxu0 0.0
        %2368 = vmatprep.subr.mxu0 0.0
        %2369 = vmatpush1.msra.mxu0 0.0
        %2370 = vmatprep.subr.mxu0 0.0
        %2371 = vmatpush1.msra.mxu0 0.0
        %2372 = vmatprep.subr.mxu0 0.0
        %2373 = vmatpush1.msra.mxu0 0.0
        %2374 = vmatprep.subr.mxu0 0.0
        %2375 = vmatpush1.msra.mxu0 0.0
        %2376 = vmatprep.subr.mxu0 0.0
        %2377 = vmatpush1.msra.mxu0 0.0
        %2378 = vmatprep.subr.mxu0 0.0
        %2379 = vmatpush1.msra.mxu0 0.0
        %2380 = vmatprep.subr.mxu0 0.0
        %2381 = vmatpush1.msra.mxu0 0.0
        %2382 = vmatprep.subr.mxu0 0.0
        %2383 = vmatpush1.msra.mxu0 0.0
        %2384 = vmatprep.subr.mxu0 0.0
        %2385 = vmatpush1.msra.mxu0 0.0
        %2386 = vmatprep.subr.mxu0 0.0
        %2387 = vmatpush1.msra.mxu0 0.0
        %2388 = vmatprep.subr.mxu0 0.0
        %2389 = vmatpush1.msra.mxu0 0.0
        %2390 = vmatprep.subr.mxu0 0.0
        %2391 = vmatpush1.msra.mxu0 0.0
        %2392 = vmatprep.subr.mxu0 0.0
        %2393 = vmatpush1.msra.mxu0 0.0
        %2394 = vmatprep.subr.mxu0 0.0
        %2395 = vmatpush1.msra.mxu0 0.0
        %2396 = vmatprep.subr.mxu0 0.0
        %2397 = vmatpush1.msra.mxu0 0.0
        %2398 = vmatprep.subr.mxu0 0.0
        %2399 = vmatpush1.msra.mxu0 0.0
        %2400 = vmatprep.subr.mxu0 0.0
        %2401 = vmatpush1.msra.mxu0 0.0
        %2402 = vmatprep.subr.mxu0 0.0
        %2403 = vmatpush1.msra.mxu0 0.0
        %2404 = vmatprep.subr.mxu0 0.0
        %2405 = vmatpush1.msra.mxu0 0.0
        %2406 = vmatprep.subr.mxu0 0.0
        %2407 = vmatpush1.msra.mxu0 0.0
        %2408 = vmatprep.mubr.f32.mxu0 0.0
        %2409 = vmatmul.mubr.f32.gmra.mrb[0].mxu0 %v1977
        %v2410 = vpop.f32.mrb[0].mxu0
        %v2411 = vadd.f32 0.0, %v2410
        %v2412 = vpop.f32.mrb[0].mxu0
        %v2413 = vadd.f32 0.0, %v2412
        %2414 = vmatprep.mubr.f32.mxu0 0.0
        %2415 = vmatmul.mubr.f32.gmra.mrb[0].mxu0 %v1980
        %v2416 = vpop.f32.mrb[0].mxu0
        %v2417 = vadd.f32 0.0, %v2416
        %v2418 = vpop.f32.mrb[0].mxu0
        %v2419 = vadd.f32 0.0, %v2418
        %2420 = vmatprep.mubr.f32.mxu0 0.0
        %2421 = vmatmul.mubr.f32.gmra.mrb[0].mxu0 %v1983
        %v2422 = vpop.f32.mrb[0].mxu0
        %v2423 = vadd.f32 0.0, %v2422
        %v2424 = vpop.f32.mrb[0].mxu0
        %v2425 = vadd.f32 0.0, %v2424
        %2426 = vmatprep.mubr.f32.mxu0 0.0
        %2427 = vmatmul.mubr.f32.gmra.mrb[0].mxu0 %v1986
        %v2428 = vpop.f32.mrb[0].mxu0
        %v2429 = vadd.f32 0.0, %v2428
        %v2430 = vpop.f32.mrb[0].mxu0
        %v2431 = vadd.f32 0.0, %v2430
        %2432 = vdwg.mxu0
        %2433 = vmatprep.subr.mxu0 %v1950
        %2434 = vmatpush1.msra.mxu0 %v1949
        %2435 = vmatprep.subr.mxu0 %v1966
        %2436 = vmatpush1.msra.mxu0 %v1965
        %2437 = vmatprep.subr.mxu0 0.0
        %2438 = vmatpush1.msra.mxu0 0.0
        %2439 = vmatprep.subr.mxu0 0.0
        %2440 = vmatpush1.msra.mxu0 0.0
        %2441 = vmatprep.subr.mxu0 0.0
        %2442 = vmatpush1.msra.mxu0 0.0
        %2443 = vmatprep.subr.mxu0 0.0
        %2444 = vmatpush1.msra.mxu0 0.0
        %2445 = vmatprep.subr.mxu0 0.0
        %2446 = vmatpush1.msra.mxu0 0.0
        %2447 = vmatprep.subr.mxu0 0.0
        %2448 = vmatpush1.msra.mxu0 0.0
        %2449 = vmatprep.subr.mxu0 0.0
        %2450 = vmatpush1.msra.mxu0 0.0
        %2451 = vmatprep.subr.mxu0 0.0
        %2452 = vmatpush1.msra.mxu0 0.0
        %2453 = vmatprep.subr.mxu0 0.0
        %2454 = vmatpush1.msra.mxu0 0.0
        %2455 = vmatprep.subr.mxu0 0.0
        %2456 = vmatpush1.msra.mxu0 0.0
        %2457 = vmatprep.subr.mxu0 0.0
        %2458 = vmatpush1.msra.mxu0 0.0
        %2459 = vmatprep.subr.mxu0 0.0
        %2460 = vmatpush1.msra.mxu0 0.0
        %2461 = vmatprep.subr.mxu0 0.0
        %2462 = vmatpush1.msra.mxu0 0.0
        %2463 = vmatprep.subr.mxu0 0.0
        %2464 = vmatpush1.msra.mxu0 0.0
        %2465 = vmatprep.subr.mxu0 0.0
        %2466 = vmatpush1.msra.mxu0 0.0
        %2467 = vmatprep.subr.mxu0 0.0
        %2468 = vmatpush1.msra.mxu0 0.0
        %2469 = vmatprep.subr.mxu0 0.0
        %2470 = vmatpush1.msra.mxu0 0.0
        %2471 = vmatprep.subr.mxu0 0.0
        %2472 = vmatpush1.msra.mxu0 0.0
        %2473 = vmatprep.subr.mxu0 0.0
        %2474 = vmatpush1.msra.mxu0 0.0
        %2475 = vmatprep.subr.mxu0 0.0
        %2476 = vmatpush1.msra.mxu0 0.0
        %2477 = vmatprep.subr.mxu0 0.0
        %2478 = vmatpush1.msra.mxu0 0.0
        %2479 = vmatprep.subr.mxu0 0.0
        %2480 = vmatpush1.msra.mxu0 0.0
        %2481 = vmatprep.subr.mxu0 0.0
        %2482 = vmatpush1.msra.mxu0 0.0
        %2483 = vmatprep.subr.mxu0 0.0
        %2484 = vmatpush1.msra.mxu0 0.0
        %2485 = vmatprep.subr.mxu0 0.0
        %2486 = vmatpush1.msra.mxu0 0.0
        %2487 = vmatprep.subr.mxu0 0.0
        %2488 = vmatpush1.msra.mxu0 0.0
        %2489 = vmatprep.subr.mxu0 0.0
        %2490 = vmatpush1.msra.mxu0 0.0
        %2491 = vmatprep.subr.mxu0 0.0
        %2492 = vmatpush1.msra.mxu0 0.0
        %2493 = vmatprep.subr.mxu0 0.0
        %2494 = vmatpush1.msra.mxu0 0.0
        %2495 = vmatprep.subr.mxu0 0.0
        %2496 = vmatpush1.msra.mxu0 0.0
        %2497 = vmatprep.mubr.f32.mxu0 0.0
        %2498 = vmatmul.mubr.f32.gmra.mrb[0].mxu0 %v1977
        %v2499 = vpop.f32.mrb[0].mxu0
        %v2500 = vadd.f32 0.0, %v2499
        %v2501 = vpop.f32.mrb[0].mxu0
        %v2502 = vadd.f32 0.0, %v2501
        %2503 = vmatprep.mubr.f32.mxu0 0.0
        %2504 = vmatmul.mubr.f32.gmra.mrb[0].mxu0 %v1980
        %v2505 = vpop.f32.mrb[0].mxu0
        %v2506 = vadd.f32 0.0, %v2505
        %v2507 = vpop.f32.mrb[0].mxu0
        %v2508 = vadd.f32 0.0, %v2507
        %2509 = vmatprep.mubr.f32.mxu0 0.0
        %2510 = vmatmul.mubr.f32.gmra.mrb[0].mxu0 %v1983
        %v2511 = vpop.f32.mrb[0].mxu0
        %v2512 = vadd.f32 0.0, %v2511
        %v2513 = vpop.f32.mrb[0].mxu0
        %v2514 = vadd.f32 0.0, %v2513
        %2515 = vmatprep.mubr.f32.mxu0 0.0
        %2516 = vmatmul.mubr.f32.gmra.mrb[0].mxu0 %v1986
        %v2517 = vpop.f32.mrb[0].mxu0
        %v2518 = vadd.f32 0.0, %v2517
        %v2519 = vpop.f32.mrb[0].mxu0
        %v2520 = vadd.f32 0.0, %v2519
        %2521 = vdwg.mxu0
        %2522 = vmatprep.subr.mxu0 %v1952
        %2523 = vmatpush1.msra.mxu0 %v1951
        %2524 = vmatprep.subr.mxu0 %v1968
        %2525 = vmatpush1.msra.mxu0 %v1967
        %2526 = vmatprep.subr.mxu0 0.0
        %2527 = vmatpush1.msra.mxu0 0.0
        %2528 = vmatprep.subr.mxu0 0.0
        %2529 = vmatpush1.msra.mxu0 0.0
        %2530 = vmatprep.subr.mxu0 0.0
        %2531 = vmatpush1.msra.mxu0 0.0
        %2532 = vmatprep.subr.mxu0 0.0
        %2533 = vmatpush1.msra.mxu0 0.0
        %2534 = vmatprep.subr.mxu0 0.0
        %2535 = vmatpush1.msra.mxu0 0.0
        %2536 = vmatprep.subr.mxu0 0.0
        %2537 = vmatpush1.msra.mxu0 0.0
        %2538 = vmatprep.subr.mxu0 0.0
        %2539 = vmatpush1.msra.mxu0 0.0
        %2540 = vmatprep.subr.mxu0 0.0
        %2541 = vmatpush1.msra.mxu0 0.0
        %2542 = vmatprep.subr.mxu0 0.0
        %2543 = vmatpush1.msra.mxu0 0.0
        %2544 = vmatprep.subr.mxu0 0.0
        %2545 = vmatpush1.msra.mxu0 0.0
        %2546 = vmatprep.subr.mxu0 0.0
        %2547 = vmatpush1.msra.mxu0 0.0
        %2548 = vmatprep.subr.mxu0 0.0
        %2549 = vmatpush1.msra.mxu0 0.0
        %2550 = vmatprep.subr.mxu0 0.0
        %2551 = vmatpush1.msra.mxu0 0.0
        %2552 = vmatprep.subr.mxu0 0.0
        %2553 = vmatpush1.msra.mxu0 0.0
        %2554 = vmatprep.subr.mxu0 0.0
        %2555 = vmatpush1.msra.mxu0 0.0
        %2556 = vmatprep.subr.mxu0 0.0
        %2557 = vmatpush1.msra.mxu0 0.0
        %2558 = vmatprep.subr.mxu0 0.0
        %2559 = vmatpush1.msra.mxu0 0.0
        %2560 = vmatprep.subr.mxu0 0.0
        %2561 = vmatpush1.msra.mxu0 0.0
        %2562 = vmatprep.subr.mxu0 0.0
        %2563 = vmatpush1.msra.mxu0 0.0
        %2564 = vmatprep.subr.mxu0 0.0
        %2565 = vmatpush1.msra.mxu0 0.0
        %2566 = vmatprep.subr.mxu0 0.0
        %2567 = vmatpush1.msra.mxu0 0.0
        %2568 = vmatprep.subr.mxu0 0.0
        %2569 = vmatpush1.msra.mxu0 0.0
        %2570 = vmatprep.subr.mxu0 0.0
        %2571 = vmatpush1.msra.mxu0 0.0
        %2572 = vmatprep.subr.mxu0 0.0
        %2573 = vmatpush1.msra.mxu0 0.0
        %2574 = vmatprep.subr.mxu0 0.0
        %2575 = vmatpush1.msra.mxu0 0.0
        %2576 = vmatprep.subr.mxu0 0.0
        %2577 = vmatpush1.msra.mxu0 0.0
        %2578 = vmatprep.subr.mxu0 0.0
        %2579 = vmatpush1.msra.mxu0 0.0
        %2580 = vmatprep.subr.mxu0 0.0
        %2581 = vmatpush1.msra.mxu0 0.0
        %2582 = vmatprep.subr.mxu0 0.0
        %2583 = vmatpush1.msra.mxu0 0.0
        %2584 = vmatprep.subr.mxu0 0.0
        %2585 = vmatpush1.msra.mxu0 0.0
        %2586 = vmatprep.mubr.f32.mxu0 0.0
        %2587 = vmatmul.mubr.f32.gmra.mrb[0].mxu0 %v1977
        %v2588 = vpop.f32.mrb[0].mxu0
        %v2589 = vadd.f32 0.0, %v2588
        %v2590 = vpop.f32.mrb[0].mxu0
        %v2591 = vadd.f32 0.0, %v2590
        %2592 = vmatprep.mubr.f32.mxu0 0.0
        %2593 = vmatmul.mubr.f32.gmra.mrb[0].mxu0 %v1980
        %v2594 = vpop.f32.mrb[0].mxu0
        %v2595 = vadd.f32 0.0, %v2594
        %v2596 = vpop.f32.mrb[0].mxu0
        %v2597 = vadd.f32 0.0, %v2596
        %2598 = vmatprep.mubr.f32.mxu0 0.0
        %2599 = vmatmul.mubr.f32.gmra.mrb[0].mxu0 %v1983
        %v2600 = vpop.f32.mrb[0].mxu0
        %v2601 = vadd.f32 0.0, %v2600
        %v2602 = vpop.f32.mrb[0].mxu0
        %v2603 = vadd.f32 0.0, %v2602
        %2604 = vmatprep.mubr.f32.mxu0 0.0
        %2605 = vmatmul.mubr.f32.gmra.mrb[0].mxu0 %v1986
        %v2606 = vpop.f32.mrb[0].mxu0
        %v2607 = vadd.f32 0.0, %v2606
        %v2608 = vpop.f32.mrb[0].mxu0
        %v2609 = vadd.f32 0.0, %v2608
        %2610 = vdwg.mxu0
        %2611 = vmatprep.subr.mxu0 %v1954
        %2612 = vmatpush1.msra.mxu0 %v1953
        %2613 = vmatprep.subr.mxu0 %v1970
        %2614 = vmatpush1.msra.mxu0 %v1969
        %2615 = vmatprep.subr.mxu0 0.0
        %2616 = vmatpush1.msra.mxu0 0.0
        %2617 = vmatprep.subr.mxu0 0.0
        %2618 = vmatpush1.msra.mxu0 0.0
        %2619 = vmatprep.subr.mxu0 0.0
        %2620 = vmatpush1.msra.mxu0 0.0
        %2621 = vmatprep.subr.mxu0 0.0
        %2622 = vmatpush1.msra.mxu0 0.0
        %2623 = vmatprep.subr.mxu0 0.0
        %2624 = vmatpush1.msra.mxu0 0.0
        %2625 = vmatprep.subr.mxu0 0.0
        %2626 = vmatpush1.msra.mxu0 0.0
        %2627 = vmatprep.subr.mxu0 0.0
        %2628 = vmatpush1.msra.mxu0 0.0
        %2629 = vmatprep.subr.mxu0 0.0
        %2630 = vmatpush1.msra.mxu0 0.0
        %2631 = vmatprep.subr.mxu0 0.0
        %2632 = vmatpush1.msra.mxu0 0.0
        %2633 = vmatprep.subr.mxu0 0.0
        %2634 = vmatpush1.msra.mxu0 0.0
        %2635 = vmatprep.subr.mxu0 0.0
        %2636 = vmatpush1.msra.mxu0 0.0
        %2637 = vmatprep.subr.mxu0 0.0
        %2638 = vmatpush1.msra.mxu0 0.0
        %2639 = vmatprep.subr.mxu0 0.0
        %2640 = vmatpush1.msra.mxu0 0.0
        %2641 = vmatprep.subr.mxu0 0.0
        %2642 = vmatpush1.msra.mxu0 0.0
        %2643 = vmatprep.subr.mxu0 0.0
        %2644 = vmatpush1.msra.mxu0 0.0
        %2645 = vmatprep.subr.mxu0 0.0
        %2646 = vmatpush1.msra.mxu0 0.0
        %2647 = vmatprep.subr.mxu0 0.0
        %2648 = vmatpush1.msra.mxu0 0.0
        %2649 = vmatprep.subr.mxu0 0.0
        %2650 = vmatpush1.msra.mxu0 0.0
        %2651 = vmatprep.subr.mxu0 0.0
        %2652 = vmatpush1.msra.mxu0 0.0
        %2653 = vmatprep.subr.mxu0 0.0
        %2654 = vmatpush1.msra.mxu0 0.0
        %2655 = vmatprep.subr.mxu0 0.0
        %2656 = vmatpush1.msra.mxu0 0.0
        %2657 = vmatprep.subr.mxu0 0.0
        %2658 = vmatpush1.msra.mxu0 0.0
        %2659 = vmatprep.subr.mxu0 0.0
        %2660 = vmatpush1.msra.mxu0 0.0
        %2661 = vmatprep.subr.mxu0 0.0
        %2662 = vmatpush1.msra.mxu0 0.0
        %2663 = vmatprep.subr.mxu0 0.0
        %2664 = vmatpush1.msra.mxu0 0.0
        %2665 = vmatprep.subr.mxu0 0.0
        %2666 = vmatpush1.msra.mxu0 0.0
        %2667 = vmatprep.subr.mxu0 0.0
        %2668 = vmatpush1.msra.mxu0 0.0
        %2669 = vmatprep.subr.mxu0 0.0
        %2670 = vmatpush1.msra.mxu0 0.0
        %2671 = vmatprep.subr.mxu0 0.0
        %2672 = vmatpush1.msra.mxu0 0.0
        %2673 = vmatprep.subr.mxu0 0.0
        %2674 = vmatpush1.msra.mxu0 0.0
        %2675 = vmatprep.mubr.f32.mxu0 0.0
        %2676 = vmatmul.mubr.f32.gmra.mrb[0].mxu0 %v1977
        %v2677 = vpop.f32.mrb[0].mxu0
        %v2678 = vadd.f32 0.0, %v2677
        %v2679 = vpop.f32.mrb[0].mxu0
        %v2680 = vadd.f32 0.0, %v2679
        %2681 = vmatprep.mubr.f32.mxu0 0.0
        %2682 = vmatmul.mubr.f32.gmra.mrb[0].mxu0 %v1980
        %v2683 = vpop.f32.mrb[0].mxu0
        %v2684 = vadd.f32 0.0, %v2683
        %v2685 = vpop.f32.mrb[0].mxu0
        %v2686 = vadd.f32 0.0, %v2685
        %2687 = vmatprep.mubr.f32.mxu0 0.0
        %2688 = vmatmul.mubr.f32.gmra.mrb[0].mxu0 %v1983
        %v2689 = vpop.f32.mrb[0].mxu0
        %v2690 = vadd.f32 0.0, %v2689
        %v2691 = vpop.f32.mrb[0].mxu0
        %v2692 = vadd.f32 0.0, %v2691
        %2693 = vmatprep.mubr.f32.mxu0 0.0
        %2694 = vmatmul.mubr.f32.gmra.mrb[0].mxu0 %v1986
        %v2695 = vpop.f32.mrb[0].mxu0
        %v2696 = vadd.f32 0.0, %v2695
        %v2697 = vpop.f32.mrb[0].mxu0
        %v2698 = vadd.f32 0.0, %v2697
        %2699 = vdwg.mxu0
        %2700 = vst [vmem:[%s186] sm:$0xff] %v2055
        %2701 = vst [vmem:[%s186 + $0x8] sm:$0xff] %v2057
        %2702 = vst [vmem:[%s186 + $0x10] sm:$0xff] %v2144
        %2703 = vst [vmem:[%s186 + $0x18] sm:$0xff] %v2146
        %2704 = vst [vmem:[%s186 + $0x20] sm:$0xff] %v2233
        %2705 = vst [vmem:[%s186 + $0x28] sm:$0xff] %v2235
        %2706 = vst [vmem:[%s186 + $0x30] sm:$0xff] %v2322
        %2707 = vst [vmem:[%s186 + $0x38] sm:$0xff] %v2324
        %2708 = vst [vmem:[%s186 + $0x40] sm:$0xff] %v2411
        %2709 = vst [vmem:[%s186 + $0x48] sm:$0xff] %v2413
        %2710 = vst [vmem:[%s186 + $0x50] sm:$0xff] %v2500
        %2711 = vst [vmem:[%s186 + $0x58] sm:$0xff] %v2502
        %2712 = vst [vmem:[%s186 + $0x60] sm:$0xff] %v2589
        %2713 = vst [vmem:[%s186 + $0x68] sm:$0xff] %v2591
        %2714 = vst [vmem:[%s186 + $0x70] sm:$0xff] %v2678
        %2715 = vst [vmem:[%s186 + $0x78] sm:$0xff] %v2680
        %2716 = vst [vmem:[%s186 + $0x80] sm:$0xff] %v2061
        %2717 = vst [vmem:[%s186 + $0x88] sm:$0xff] %v2063
        %2718 = vst [vmem:[%s186 + $0x90] sm:$0xff] %v2150
        %2719 = vst [vmem:[%s186 + $0x98] sm:$0xff] %v2152
        %2720 = vst [vmem:[%s186 + $0xa0] sm:$0xff] %v2239
        %2721 = vst [vmem:[%s186 + $0xa8] sm:$0xff] %v2241
        %2722 = vst [vmem:[%s186 + $0xb0] sm:$0xff] %v2328
        %2723 = vst [vmem:[%s186 + $0xb8] sm:$0xff] %v2330
        %2724 = vst [vmem:[%s186 + $0xc0] sm:$0xff] %v2417
        %2725 = vst [vmem:[%s186 + $0xc8] sm:$0xff] %v2419
        %2726 = vst [vmem:[%s186 + $0xd0] sm:$0xff] %v2506
        %2727 = vst [vmem:[%s186 + $0xd8] sm:$0xff] %v2508
        %2728 = vst [vmem:[%s186 + $0xe0] sm:$0xff] %v2595
        %2729 = vst [vmem:[%s186 + $0xe8] sm:$0xff] %v2597
        %2730 = vst [vmem:[%s186 + $0xf0] sm:$0xff] %v2684
        %2731 = vst [vmem:[%s186 + $0xf8] sm:$0xff] %v2686
        %2732 = vst [vmem:[%s186 + $0x100] sm:$0xff] %v2067
        %2733 = vst [vmem:[%s186 + $0x108] sm:$0xff] %v2069
        %2734 = vst [vmem:[%s186 + $0x110] sm:$0xff] %v2156
        %2735 = vst [vmem:[%s186 + $0x118] sm:$0xff] %v2158
        %2736 = vst [vmem:[%s186 + $0x120] sm:$0xff] %v2245
        %2737 = vst [vmem:[%s186 + $0x128] sm:$0xff] %v2247
        %2738 = vst [vmem:[%s186 + $0x130] sm:$0xff] %v2334
        %2739 = vst [vmem:[%s186 + $0x138] sm:$0xff] %v2336
        %2740 = vst [vmem:[%s186 + $0x140] sm:$0xff] %v2423
        %2741 = vst [vmem:[%s186 + $0x148] sm:$0xff] %v2425
        %2742 = vst [vmem:[%s186 + $0x150] sm:$0xff] %v2512
        %2743 = vst [vmem:[%s186 + $0x158] sm:$0xff] %v2514
        %2744 = vst [vmem:[%s186 + $0x160] sm:$0xff] %v2601
        %2745 = vst [vmem:[%s186 + $0x168] sm:$0xff] %v2603
        %2746 = vst [vmem:[%s186 + $0x170] sm:$0xff] %v2690
        %2747 = vst [vmem:[%s186 + $0x178] sm:$0xff] %v2692
        %2748 = vst [vmem:[%s186 + $0x180] sm:$0xff] %v2073
        %2749 = vst [vmem:[%s186 + $0x188] sm:$0xff] %v2075
        %2750 = vst [vmem:[%s186 + $0x190] sm:$0xff] %v2162
        %2751 = vst [vmem:[%s186 + $0x198] sm:$0xff] %v2164
        %2752 = vst [vmem:[%s186 + $0x1a0] sm:$0xff] %v2251
        %2753 = vst [vmem:[%s186 + $0x1a8] sm:$0xff] %v2253
        %2754 = vst [vmem:[%s186 + $0x1b0] sm:$0xff] %v2340
        %2755 = vst [vmem:[%s186 + $0x1b8] sm:$0xff] %v2342
        %2756 = vst [vmem:[%s186 + $0x1c0] sm:$0xff] %v2429
        %2757 = vst [vmem:[%s186 + $0x1c8] sm:$0xff] %v2431
        %2758 = vst [vmem:[%s186 + $0x1d0] sm:$0xff] %v2518
        %2759 = vst [vmem:[%s186 + $0x1d8] sm:$0xff] %v2520
        %2760 = vst [vmem:[%s186 + $0x1e0] sm:$0xff] %v2607
        %2761 = vst [vmem:[%s186 + $0x1e8] sm:$0xff] %v2609
        %2762 = vst [vmem:[%s186 + $0x1f0] sm:$0xff] %v2696
        %2763 = vst [vmem:[%s186 + $0x1f8] sm:$0xff] %v2698
        %s2764 = sand.u32 %s96, 1
        %s2765 = scalar_lea.sflag [#allocation4], %s2764
        %s2766 = sand.u32 %s96, 1
        %s2767 = smul.addr %s2766, 512
        %s2768 = scalar_lea.vmem [#allocation5], %s2767
        // Predicated region
        $region37: #{tpu_custom_call.1} parent=31 // pred_check
          %p2769 = pneg %p106
        $region38: #{tpu_custom_call.1} parent=31 // pred_check_branch
          %2771 = sbr.rel (%p2769) target = $region40
        $region39: #{tpu_custom_call.1} parent=31 // pred_region
          %s2772 = smul.u32 16, %s20
          %s2774 = ssub.s32 8192, 8192
          %2775 = vsyncadd %s2765, %s2774
          %s2776 = smul.addr %s2772, 128
          %s2777 = scalar_lea.hbm %s3, %s2776
          %s2778 = sshll.u32 %s2768, 4
          %s2779 = int_to_ptr.vmem [resolvable:$true] %s2778
          %2784 = dma.vmem_to_hbm [thread:$0]  %s2779, 8192, %s2777, %s2765, 2048, 4096, 128
        $region40: #{tpu_custom_call.1} parent=31 // pred_fallthru
          _
      $region32: #{tpu_custom_call.1} parent=5 // pred_fallthru
        _
      %p2785 = scmp.le.s32.totalorder 2, %s15
      // Predicated region
      $region41: #{tpu_custom_call.1} parent=5 // pred_check
        %p2786 = pneg %p2785
      $region42: #{tpu_custom_call.1} parent=5 // pred_check_branch
        %2788 = sbr.rel (%p2786) target = $region44
      $region43: #{tpu_custom_call.1} parent=5 // pred_region
        %s2789 = ssub.s32 %s15, 2
        // Predicated region
        $region45: #{tpu_custom_call.1} parent=43 // pred_check
          %p2790 = pneg %p112
        $region46: #{tpu_custom_call.1} parent=43 // pred_check_branch
          %2792 = sbr.rel (%p2790) target = $region48
        $region47: #{tpu_custom_call.1} parent=43 // pred_region
          %s2793 = sand.u32 %s97, 1
          %s2794 = scalar_lea.sflag [#allocation4], %s2793
          %s2795 = sand.u32 %s97, 1
          %s2796 = smul.addr %s2795, 512
          %s2797 = scalar_lea.vmem [#allocation5], %s2796
          %2798 = dma.done %s2794, 8192
        $region48: #{tpu_custom_call.1} parent=43 // pred_fallthru
          _
      $region44: #{tpu_custom_call.1} parent=5 // pred_fallthru
        _
    $region6: #{tpu_custom_call.1} parent=1 // loop_footer
      %s19 = sadd.s32 1, %s15
    $region7: #{tpu_custom_call.1} parent=1 // loop_footer_branch
      %14 = sbr.rel target = $region3
    $region8: #{tpu_custom_call.1} parent=1 // loop_exit
      _
    %2799 = vsyncpa [#allocation3], 1
    %s2800 = scalar_lea.sflag [#allocation3], 1
    %2801 = vsyncpa %s2800, 1
    %2802 = vsyncpa [#allocation4], 1
    %s2803 = scalar_lea.sflag [#allocation4], 1
    %2804 = vsyncpa %s2803, 1

</llo_original>
